<compile_context>
chip_gen: v7x
topology: tpu7x:2x2x1
jax: 0.10.0
libtpu: 0.0.40
codegen_flags: <defaults>
</compile_context>

<pallas_src>
import jax
import jax.numpy as jnp
from jax import lax
from jax.experimental import pallas as pl
from jax.experimental.pallas import tpu as pltpu

LANE = 128   # lane-dense padded width for the logits slab / one-hot vocab pad
SUB = 8      # sublane tile; batch is padded to this


def _round_up(x, m):
    return (x + m - 1) // m * m


def make_kernel(*, n_layers, seq_len, batch_pad, vocab_pad, wl, hidden,
                offs_a, offs_b, ln_eps=1e-5):
    """Fused one-hot gather + stacked tanh RNN + LayerNorm + MLP head."""
    T, Bp, Vp, WL, H = seq_len, batch_pad, vocab_pad, wl, hidden
    TB = T * Bp

    def kernel(tok_ref, a_ref, b_ref, out_ref, h_scr):
        # ---- Embedding gather as ONE MXU matmul: one_hot(TB,Vp) @ emb(Vp,WL).
        tok = tok_ref[...]                                        # (TB, 1) int32
        col = lax.broadcasted_iota(jnp.int32, (TB, Vp), 1)
        onehot = (col == tok).astype(jnp.float32)                 # (TB, Vp)
        emb = a_ref[pl.ds(offs_a["emb"], Vp), :]                  # (Vp, WL)
        x_all = jnp.dot(onehot, emb, preferred_element_type=jnp.float32)  # (TB, WL)

        # ---- Layer-major Elman RNN (tanh); rows are time-major (t*Bp + b).
        h = None
        for l in range(n_layers):
            wihT = a_ref[pl.ds(offs_a["wih", l], WL), :]          # (WL, WL), pre-T
            whhT = a_ref[pl.ds(offs_a["whh", l], WL), :]          # (WL, WL), pre-T
            bias = a_ref[pl.ds(offs_a["bias", l], 1), :]          # (1, WL) = bih+bhh
            # Every timestep's input projection in one batched MXU matmul.
            proj = jnp.dot(x_all, wihT, preferred_element_type=jnp.float32) + bias
            write_scr = l + 1 < n_layers
            # Serial chain: only the (Bp,WL)@(WL,WL) recurrent matmul + tanh.
            h = jnp.tanh(proj[0:Bp, :])                           # t = 0 (h_{-1}=0)
            if write_scr:
                h_scr[pl.ds(0, Bp), :] = h                        # aligned vst
            for t in range(1, T):
                h = jnp.tanh(
                    proj[t * Bp:(t + 1) * Bp, :]
                    + jnp.dot(h, whhT, preferred_element_type=jnp.float32))
                if write_scr:
                    h_scr[pl.ds(t * Bp, Bp), :] = h               # aligned vst
            if write_scr:
                x_all = h_scr[...]                                # next layer input

        # ---- LayerNorm over the H real features of the top layer's last step.
        hl = h[:, :H]                                             # no-op when H == WL
        mean = jnp.mean(hl, axis=-1, keepdims=True)
        cen = hl - mean
        var = jnp.mean(cen * cen, axis=-1, keepdims=True)
        gamma = a_ref[pl.ds(offs_a["gamma"], 1), :][:, :H]
        beta = a_ref[pl.ds(offs_a["beta"], 1), :][:, :H]
        h_norm = cen * lax.rsqrt(var + ln_eps) * gamma + beta     # (Bp, H)

        # ---- Dropout (eval) = identity; fc1 -> ReLU -> fc2 (lane-dense 128).
        fc1T = a_ref[pl.ds(offs_a["fc1"], H), :]                  # (H, WL), cols>=16 zero
        b1 = a_ref[pl.ds(offs_a["b1"], 1), :]                     # (1, WL)
        z = jnp.maximum(
            jnp.dot(h_norm, fc1T, preferred_element_type=jnp.float32) + b1, 0.0)
        fc2T = b_ref[pl.ds(offs_b["fc2"], WL), :]                 # (WL, 128)
        b2 = b_ref[pl.ds(offs_b["b2"], 1), :]                     # (1, 128)
        logits = jnp.dot(z, fc2T, preferred_element_type=jnp.float32) + b2
        out_ref[...] = logits.astype(out_ref.dtype)               # (Bp, 128) unmasked vst

    return kernel


def sentiment_classifier_forward(token_ids, params):
    """token_ids: (B, T) int32 -> logits (B, n_classes) f32."""
    B, T = token_ids.shape
    emb = params["embedding"].astype(jnp.float32)                 # (V, E)
    V, E = emb.shape
    H = params["rnn"][0]["whh"].shape[0]
    C = params["fc2_w"].shape[0]
    n_layers = len(params["rnn"])

    Bp = _round_up(B, SUB)
    Vp = _round_up(V, LANE)
    WL = max(_round_up(E, SUB), _round_up(H, SUB), 16)            # common lane width
    f32 = jnp.float32

    def pad2d(a, rows, cols):
        a = jnp.asarray(a, f32)
        return jnp.zeros((rows, cols), f32).at[:a.shape[0], :a.shape[1]].set(a)

    # ---- Pack all weights/biases into TWO contiguous slabs -> 2 weight DMAs.
    offs_a, pieces_a = {}, []
    row = 0

    def push_a(name, a, rows):
        nonlocal row
        offs_a[name] = row
        pieces_a.append(pad2d(a, rows, WL))
        row += rows

    push_a("emb", emb, Vp)                                        # (Vp, WL)
    for l, lp in enumerate(params["rnn"]):
        push_a(("wih", l), lp["wih"].T, WL)                       # (in_dim, H) padded
        push_a(("whh", l), lp["whh"].T, WL)                       # (H, H) padded
        push_a(("bias", l), (lp["bih"] + lp["bhh"]).reshape(1, -1), SUB)
    push_a("gamma", params["ln_w"].reshape(1, -1), SUB)
    push_a("beta", params["ln_b"].reshape(1, -1), SUB)
    push_a("fc1", params["fc1_w"].T, _round_up(H, SUB))           # (H, 16) padded
    push_a("b1", params["fc1_b"].reshape(1, -1), SUB)
    slab_a = jnp.concatenate(pieces_a, axis=0)                    # (rows, WL)

    offs_b = {"fc2": 0, "b2": WL}
    slab_b = jnp.concatenate(
        [pad2d(params["fc2_w"].T, WL, LANE),                      # (16, C) padded
         pad2d(params["fc2_b"].reshape(1, -1), SUB, LANE)], axis=0)

    # ---- Token ids: time-major rows (t*Bp + b), batch zero-padded to 8 sublanes.
    tok = jnp.zeros((T, Bp), jnp.int32).at[:, :B].set(token_ids.astype(jnp.int32).T)
    tok_col = tok.reshape(T * Bp, 1)

    kernel = make_kernel(n_layers=n_layers, seq_len=T, batch_pad=Bp, vocab_pad=Vp,
                         wl=WL, hidden=H, offs_a=offs_a, offs_b=offs_b)

    out = pl.pallas_call(
        kernel,
        out_shape=jax.ShapeDtypeStruct((Bp, LANE), jnp.float32),
        grid_spec=pltpu.PrefetchScalarGridSpec(
            num_scalar_prefetch=0,
            grid=(1,),   # TODO(synk): batch-tile this axis (multiple of 8 rows) for v7x megacore.
            in_specs=[pl.BlockSpec((T * Bp, 1), lambda i: (0, 0)),
                      pl.BlockSpec(slab_a.shape, lambda i: (0, 0)),
                      pl.BlockSpec(slab_b.shape, lambda i: (0, 0))],
            out_specs=pl.BlockSpec((Bp, LANE), lambda i: (0, 0)),
            scratch_shapes=[pltpu.VMEM((T * Bp, WL), jnp.float32)],
        ),
        compiler_params=pltpu.CompilerParams(dimension_semantics=("parallel",)),
    )(tok_col, slab_a, slab_b)
    return out[:B, :C]


def reference_forward(token_ids, params):
    """Pure-JAX reference mirroring the PyTorch forward (eval mode)."""
    x = params["embedding"][token_ids].astype(jnp.float32)
    B = x.shape[0]
    H = params["rnn"][0]["whh"].shape[0]
    hs = [jnp.zeros((B, H), jnp.float32) for _ in params["rnn"]]
    for t in range(x.shape[1]):
        inp = x[:, t, :]
        for l, lp in enumerate(params["rnn"]):
            hs[l] = jnp.tanh(inp @ lp["wih"].T + lp["bih"]
                             + hs[l] @ lp["whh"].T + lp["bhh"])
            inp = hs[l]
    h = hs[-1]
    mean = jnp.mean(h, axis=-1, keepdims=True)
    var = jnp.mean((h - mean) ** 2, axis=-1, keepdims=True)
    h = (h - mean) / jnp.sqrt(var + 1e-5) * params["ln_w"] + params["ln_b"]
    z = jnp.maximum(h @ params["fc1_w"].T + params["fc1_b"], 0.0)
    return z @ params["fc2_w"].T + params["fc2_b"]


def init_params(key, vocab_size, embedding_dim, hidden_size, n_layers, n_classes):
    keys = jax.random.split(key, 6 + 4 * n_layers)
    ki = iter(range(len(keys)))

    def unif(k, shape, scale):
        return jax.random.uniform(k, shape, jnp.float32, -scale, scale)

    params = {
        "embedding": jax.random.normal(keys[next(ki)], (vocab_size, embedding_dim),
                                       jnp.float32),
        "rnn": [],
    }
    s = 1.0 / jnp.sqrt(hidden_size)
    for l in range(n_layers):
        in_dim = embedding_dim if l == 0 else hidden_size
        params["rnn"].append({
            "wih": unif(keys[next(ki)], (hidden_size, in_dim), s),
            "whh": unif(keys[next(ki)], (hidden_size, hidden_size), s),
            "bih": unif(keys[next(ki)], (hidden_size,), s),
            "bhh": unif(keys[next(ki)], (hidden_size,), s),
        })
    params["ln_w"] = jnp.ones((hidden_size,), jnp.float32)
    params["ln_b"] = jnp.zeros((hidden_size,), jnp.float32)
    s1 = 1.0 / jnp.sqrt(hidden_size)
    params["fc1_w"] = unif(keys[next(ki)], (16, hidden_size), s1)
    params["fc1_b"] = unif(keys[next(ki)], (16,), s1)
    s2 = 1.0 / jnp.sqrt(16.0)
    params["fc2_w"] = unif(keys[next(ki)], (n_classes, 16), s2)
    params["fc2_b"] = unif(keys[next(ki)], (n_classes,), s2)
    return params


if __name__ == "__main__":
    VOCAB, EMB, HID, NLAYERS, NCLASSES = 100, 32, 32, 2, 3
    BATCH, SEQ = 2, 8

    key = jax.random.PRNGKey(0)
    pkey, dkey = jax.random.split(key)
    params = init_params(pkey, VOCAB, EMB, HID, NLAYERS, NCLASSES)
    token_ids = jax.random.randint(dkey, (BATCH, SEQ), 0, VOCAB, dtype=jnp.int32)

    logits = sentiment_classifier_forward(token_ids, params)
    logits = jax.block_until_ready(logits)

    ref = reference_forward(token_ids, params)
    assert logits.shape == (BATCH, NCLASSES)
    assert jnp.allclose(logits, ref, rtol=1e-4, atol=1e-4), (logits, ref)
    print("KERNEL_OK")
</pallas_src>

<mosaic_0001>
module attributes {stable_mosaic.version = 11 : i64} {
  func.func @kernel(%arg0: i32, %arg1: memref<64x1xi32, #tpu.memory_space<vmem>>, %arg2: memref<328x32xf32, #tpu.memory_space<vmem>>, %arg3: memref<40x128xf32, #tpu.memory_space<vmem>>, %arg4: memref<8x128xf32, #tpu.memory_space<vmem>>, %arg5: memref<64x32xf32, #tpu.memory_space<vmem>>) attributes {dimension_semantics = [#tpu.dimension_semantics<parallel>], iteration_bounds = array<i64: 1>, scalar_prefetch = 0 : i64, scratch_operands = 1 : i64, tpu.core_type = #tpu.core_type<tc>, window_params = [{pipeline_mode = #tpu.pipeline_mode<synchronous>, transform_indices = @transform_0, window_bounds = array<i64: 64, 1>}, {pipeline_mode = #tpu.pipeline_mode<synchronous>, transform_indices = @transform_1, window_bounds = array<i64: 328, 32>}, {pipeline_mode = #tpu.pipeline_mode<synchronous>, transform_indices = @transform_2, window_bounds = array<i64: 40, 128>}, {pipeline_mode = #tpu.pipeline_mode<synchronous>, transform_indices = @transform_3, window_bounds = array<i64: 8, 128>}]} {
    %c0 = arith.constant 0 : index
    %c0_0 = arith.constant 0 : index
    %0 = vector.load %arg1[%c0, %c0_0] : memref<64x1xi32, #tpu.memory_space<vmem>>, vector<64x1xi32>
    %1 = tpu.iota {dimensions = array<i32: 1>} : vector<64x128xi32>
    %2 = vector.broadcast %0 : vector<64x1xi32> to vector<64x128xi32>
    %3 = arith.cmpi eq, %1, %2 : vector<64x128xi32>
    %4 = arith.extui %3 : vector<64x128xi1> to vector<64x128xi32>
    %5 = arith.sitofp %4 : vector<64x128xi32> to vector<64x128xf32>
    %c0_1 = arith.constant 0 : index
    %c0_2 = arith.constant 0 : index
    %6 = vector.load %arg2[%c0_1, %c0_2] : memref<328x32xf32, #tpu.memory_space<vmem>>, vector<128x32xf32>
    %cst = arith.constant dense<0.000000e+00> : vector<64x32xf32>
    %7 = tpu.matmul %5, %6, %cst {dimension_numbers = #tpu.dot_dimension_numbers<[1], [0], [0], [1], [0, 0, 1, 1], [], []>} : vector<64x128xf32>, vector<128x32xf32>, vector<64x32xf32> -> vector<64x32xf32>
    %c128 = arith.constant 128 : index
    %c0_3 = arith.constant 0 : index
    %8 = vector.load %arg2[%c128, %c0_3] : memref<328x32xf32, #tpu.memory_space<vmem>>, vector<32x32xf32>
    %c160 = arith.constant 160 : index
    %c0_4 = arith.constant 0 : index
    %9 = vector.load %arg2[%c160, %c0_4] : memref<328x32xf32, #tpu.memory_space<vmem>>, vector<32x32xf32>
    %c192 = arith.constant 192 : index
    %c0_5 = arith.constant 0 : index
    %10 = vector.load %arg2[%c192, %c0_5] : memref<328x32xf32, #tpu.memory_space<vmem>>, vector<1x32xf32>
    %cst_6 = arith.constant dense<0.000000e+00> : vector<64x32xf32>
    %11 = tpu.matmul %7, %8, %cst_6 {dimension_numbers = #tpu.dot_dimension_numbers<[1], [0], [0], [1], [0, 0, 1, 1], [], []>} : vector<64x32xf32>, vector<32x32xf32>, vector<64x32xf32> -> vector<64x32xf32>
    %12 = vector.broadcast %10 : vector<1x32xf32> to vector<64x32xf32>
    %13 = arith.addf %11, %12 : vector<64x32xf32>
    %14 = vector.extract_strided_slice %13 {offsets = [0, 0], sizes = [8, 32], strides = [1, 1]} : vector<64x32xf32> to vector<8x32xf32>
    %15 = math.tanh %14 : vector<8x32xf32>
    %c0_7 = arith.constant 0 : index
    %c0_8 = arith.constant 0 : index
    %16 = vector.load %arg5[%c0_7, %c0_8] : memref<64x32xf32, #tpu.memory_space<vmem>>, vector<8x32xf32>
    tpu.vector_store %arg5[%c0_7, %c0_8], %15 {strides = array<i32>} : memref<64x32xf32, #tpu.memory_space<vmem>>, vector<8x32xf32>,
    %17 = vector.extract_strided_slice %13 {offsets = [8, 0], sizes = [8, 32], strides = [1, 1]} : vector<64x32xf32> to vector<8x32xf32>
    %cst_9 = arith.constant dense<0.000000e+00> : vector<8x32xf32>
    %18 = tpu.matmul %15, %9, %cst_9 {dimension_numbers = #tpu.dot_dimension_numbers<[1], [0], [0], [1], [0, 0, 1, 1], [], []>} : vector<8x32xf32>, vector<32x32xf32>, vector<8x32xf32> -> vector<8x32xf32>
    %19 = arith.addf %17, %18 : vector<8x32xf32>
    %20 = math.tanh %19 : vector<8x32xf32>
    %c8 = arith.constant 8 : index
    %c0_10 = arith.constant 0 : index
    %21 = vector.load %arg5[%c8, %c0_10] : memref<64x32xf32, #tpu.memory_space<vmem>>, vector<8x32xf32>
    tpu.vector_store %arg5[%c8, %c0_10], %20 {strides = array<i32>} : memref<64x32xf32, #tpu.memory_space<vmem>>, vector<8x32xf32>,
    %22 = vector.extract_strided_slice %13 {offsets = [16, 0], sizes = [8, 32], strides = [1, 1]} : vector<64x32xf32> to vector<8x32xf32>
    %cst_11 = arith.constant dense<0.000000e+00> : vector<8x32xf32>
    %23 = tpu.matmul %20, %9, %cst_11 {dimension_numbers = #tpu.dot_dimension_numbers<[1], [0], [0], [1], [0, 0, 1, 1], [], []>} : vector<8x32xf32>, vector<32x32xf32>, vector<8x32xf32> -> vector<8x32xf32>
    %24 = arith.addf %22, %23 : vector<8x32xf32>
    %25 = math.tanh %24 : vector<8x32xf32>
    %c16 = arith.constant 16 : index
    %c0_12 = arith.constant 0 : index
    %26 = vector.load %arg5[%c16, %c0_12] : memref<64x32xf32, #tpu.memory_space<vmem>>, vector<8x32xf32>
    tpu.vector_store %arg5[%c16, %c0_12], %25 {strides = array<i32>} : memref<64x32xf32, #tpu.memory_space<vmem>>, vector<8x32xf32>,
    %27 = vector.extract_strided_slice %13 {offsets = [24, 0], sizes = [8, 32], strides = [1, 1]} : vector<64x32xf32> to vector<8x32xf32>
    %cst_13 = arith.constant dense<0.000000e+00> : vector<8x32xf32>
    %28 = tpu.matmul %25, %9, %cst_13 {dimension_numbers = #tpu.dot_dimension_numbers<[1], [0], [0], [1], [0, 0, 1, 1], [], []>} : vector<8x32xf32>, vector<32x32xf32>, vector<8x32xf32> -> vector<8x32xf32>
    %29 = arith.addf %27, %28 : vector<8x32xf32>
    %30 = math.tanh %29 : vector<8x32xf32>
    %c24 = arith.constant 24 : index
    %c0_14 = arith.constant 0 : index
    %31 = vector.load %arg5[%c24, %c0_14] : memref<64x32xf32, #tpu.memory_space<vmem>>, vector<8x32xf32>
    tpu.vector_store %arg5[%c24, %c0_14], %30 {strides = array<i32>} : memref<64x32xf32, #tpu.memory_space<vmem>>, vector<8x32xf32>,
    %32 = vector.extract_strided_slice %13 {offsets = [32, 0], sizes = [8, 32], strides = [1, 1]} : vector<64x32xf32> to vector<8x32xf32>
    %cst_15 = arith.constant dense<0.000000e+00> : vector<8x32xf32>
    %33 = tpu.matmul %30, %9, %cst_15 {dimension_numbers = #tpu.dot_dimension_numbers<[1], [0], [0], [1], [0, 0, 1, 1], [], []>} : vector<8x32xf32>, vector<32x32xf32>, vector<8x32xf32> -> vector<8x32xf32>
    %34 = arith.addf %32, %33 : vector<8x32xf32>
    %35 = math.tanh %34 : vector<8x32xf32>
    %c32 = arith.constant 32 : index
    %c0_16 = arith.constant 0 : index
    %36 = vector.load %arg5[%c32, %c0_16] : memref<64x32xf32, #tpu.memory_space<vmem>>, vector<8x32xf32>
    tpu.vector_store %arg5[%c32, %c0_16], %35 {strides = array<i32>} : memref<64x32xf32, #tpu.memory_space<vmem>>, vector<8x32xf32>,
    %37 = vector.extract_strided_slice %13 {offsets = [40, 0], sizes = [8, 32], strides = [1, 1]} : vector<64x32xf32> to vector<8x32xf32>
    %cst_17 = arith.constant dense<0.000000e+00> : vector<8x32xf32>
    %38 = tpu.matmul %35, %9, %cst_17 {dimension_numbers = #tpu.dot_dimension_numbers<[1], [0], [0], [1], [0, 0, 1, 1], [], []>} : vector<8x32xf32>, vector<32x32xf32>, vector<8x32xf32> -> vector<8x32xf32>
    %39 = arith.addf %37, %38 : vector<8x32xf32>
    %40 = math.tanh %39 : vector<8x32xf32>
    %c40 = arith.constant 40 : index
    %c0_18 = arith.constant 0 : index
    %41 = vector.load %arg5[%c40, %c0_18] : memref<64x32xf32, #tpu.memory_space<vmem>>, vector<8x32xf32>
    tpu.vector_store %arg5[%c40, %c0_18], %40 {strides = array<i32>} : memref<64x32xf32, #tpu.memory_space<vmem>>, vector<8x32xf32>,
    %42 = vector.extract_strided_slice %13 {offsets = [48, 0], sizes = [8, 32], strides = [1, 1]} : vector<64x32xf32> to vector<8x32xf32>
    %cst_19 = arith.constant dense<0.000000e+00> : vector<8x32xf32>
    %43 = tpu.matmul %40, %9, %cst_19 {dimension_numbers = #tpu.dot_dimension_numbers<[1], [0], [0], [1], [0, 0, 1, 1], [], []>} : vector<8x32xf32>, vector<32x32xf32>, vector<8x32xf32> -> vector<8x32xf32>
    %44 = arith.addf %42, %43 : vector<8x32xf32>
    %45 = math.tanh %44 : vector<8x32xf32>
    %c48 = arith.constant 48 : index
    %c0_20 = arith.constant 0 : index
    %46 = vector.load %arg5[%c48, %c0_20] : memref<64x32xf32, #tpu.memory_space<vmem>>, vector<8x32xf32>
    tpu.vector_store %arg5[%c48, %c0_20], %45 {strides = array<i32>} : memref<64x32xf32, #tpu.memory_space<vmem>>, vector<8x32xf32>,
    %47 = vector.extract_strided_slice %13 {offsets = [56, 0], sizes = [8, 32], strides = [1, 1]} : vector<64x32xf32> to vector<8x32xf32>
    %cst_21 = arith.constant dense<0.000000e+00> : vector<8x32xf32>
    %48 = tpu.matmul %45, %9, %cst_21 {dimension_numbers = #tpu.dot_dimension_numbers<[1], [0], [0], [1], [0, 0, 1, 1], [], []>} : vector<8x32xf32>, vector<32x32xf32>, vector<8x32xf32> -> vector<8x32xf32>
    %49 = arith.addf %47, %48 : vector<8x32xf32>
    %50 = math.tanh %49 : vector<8x32xf32>
    %c56 = arith.constant 56 : index
    %c0_22 = arith.constant 0 : index
    %51 = vector.load %arg5[%c56, %c0_22] : memref<64x32xf32, #tpu.memory_space<vmem>>, vector<8x32xf32>
    tpu.vector_store %arg5[%c56, %c0_22], %50 {strides = array<i32>} : memref<64x32xf32, #tpu.memory_space<vmem>>, vector<8x32xf32>,
    %c0_23 = arith.constant 0 : index
    %c0_24 = arith.constant 0 : index
    %52 = vector.load %arg5[%c0_23, %c0_24] : memref<64x32xf32, #tpu.memory_space<vmem>>, vector<64x32xf32>
    %c200 = arith.constant 200 : index
    %c0_25 = arith.constant 0 : index
    %53 = vector.load %arg2[%c200, %c0_25] : memref<328x32xf32, #tpu.memory_space<vmem>>, vector<32x32xf32>
    %c232 = arith.constant 232 : index
    %c0_26 = arith.constant 0 : index
    %54 = vector.load %arg2[%c232, %c0_26] : memref<328x32xf32, #tpu.memory_space<vmem>>, vector<32x32xf32>
    %c264 = arith.constant 264 : index
    %c0_27 = arith.constant 0 : index
    %55 = vector.load %arg2[%c264, %c0_27] : memref<328x32xf32, #tpu.memory_space<vmem>>, vector<1x32xf32>
    %cst_28 = arith.constant dense<0.000000e+00> : vector<64x32xf32>
    %56 = tpu.matmul %52, %53, %cst_28 {dimension_numbers = #tpu.dot_dimension_numbers<[1], [0], [0], [1], [0, 0, 1, 1], [], []>} : vector<64x32xf32>, vector<32x32xf32>, vector<64x32xf32> -> vector<64x32xf32>
    %57 = vector.broadcast %55 : vector<1x32xf32> to vector<64x32xf32>
    %58 = arith.addf %56, %57 : vector<64x32xf32>
    %59 = vector.extract_strided_slice %58 {offsets = [0, 0], sizes = [8, 32], strides = [1, 1]} : vector<64x32xf32> to vector<8x32xf32>
    %60 = math.tanh %59 : vector<8x32xf32>
    %61 = vector.extract_strided_slice %58 {offsets = [8, 0], sizes = [8, 32], strides = [1, 1]} : vector<64x32xf32> to vector<8x32xf32>
    %cst_29 = arith.constant dense<0.000000e+00> : vector<8x32xf32>
    %62 = tpu.matmul %60, %54, %cst_29 {dimension_numbers = #tpu.dot_dimension_numbers<[1], [0], [0], [1], [0, 0, 1, 1], [], []>} : vector<8x32xf32>, vector<32x32xf32>, vector<8x32xf32> -> vector<8x32xf32>
    %63 = arith.addf %61, %62 : vector<8x32xf32>
    %64 = math.tanh %63 : vector<8x32xf32>
    %65 = vector.extract_strided_slice %58 {offsets = [16, 0], sizes = [8, 32], strides = [1, 1]} : vector<64x32xf32> to vector<8x32xf32>
    %cst_30 = arith.constant dense<0.000000e+00> : vector<8x32xf32>
    %66 = tpu.matmul %64, %54, %cst_30 {dimension_numbers = #tpu.dot_dimension_numbers<[1], [0], [0], [1], [0, 0, 1, 1], [], []>} : vector<8x32xf32>, vector<32x32xf32>, vector<8x32xf32> -> vector<8x32xf32>
    %67 = arith.addf %65, %66 : vector<8x32xf32>
    %68 = math.tanh %67 : vector<8x32xf32>
    %69 = vector.extract_strided_slice %58 {offsets = [24, 0], sizes = [8, 32], strides = [1, 1]} : vector<64x32xf32> to vector<8x32xf32>
    %cst_31 = arith.constant dense<0.000000e+00> : vector<8x32xf32>
    %70 = tpu.matmul %68, %54, %cst_31 {dimension_numbers = #tpu.dot_dimension_numbers<[1], [0], [0], [1], [0, 0, 1, 1], [], []>} : vector<8x32xf32>, vector<32x32xf32>, vector<8x32xf32> -> vector<8x32xf32>
    %71 = arith.addf %69, %70 : vector<8x32xf32>
    %72 = math.tanh %71 : vector<8x32xf32>
    %73 = vector.extract_strided_slice %58 {offsets = [32, 0], sizes = [8, 32], strides = [1, 1]} : vector<64x32xf32> to vector<8x32xf32>
    %cst_32 = arith.constant dense<0.000000e+00> : vector<8x32xf32>
    %74 = tpu.matmul %72, %54, %cst_32 {dimension_numbers = #tpu.dot_dimension_numbers<[1], [0], [0], [1], [0, 0, 1, 1], [], []>} : vector<8x32xf32>, vector<32x32xf32>, vector<8x32xf32> -> vector<8x32xf32>
    %75 = arith.addf %73, %74 : vector<8x32xf32>
    %76 = math.tanh %75 : vector<8x32xf32>
    %77 = vector.extract_strided_slice %58 {offsets = [40, 0], sizes = [8, 32], strides = [1, 1]} : vector<64x32xf32> to vector<8x32xf32>
    %cst_33 = arith.constant dense<0.000000e+00> : vector<8x32xf32>
    %78 = tpu.matmul %76, %54, %cst_33 {dimension_numbers = #tpu.dot_dimension_numbers<[1], [0], [0], [1], [0, 0, 1, 1], [], []>} : vector<8x32xf32>, vector<32x32xf32>, vector<8x32xf32> -> vector<8x32xf32>
    %79 = arith.addf %77, %78 : vector<8x32xf32>
    %80 = math.tanh %79 : vector<8x32xf32>
    %81 = vector.extract_strided_slice %58 {offsets = [48, 0], sizes = [8, 32], strides = [1, 1]} : vector<64x32xf32> to vector<8x32xf32>
    %cst_34 = arith.constant dense<0.000000e+00> : vector<8x32xf32>
    %82 = tpu.matmul %80, %54, %cst_34 {dimension_numbers = #tpu.dot_dimension_numbers<[1], [0], [0], [1], [0, 0, 1, 1], [], []>} : vector<8x32xf32>, vector<32x32xf32>, vector<8x32xf32> -> vector<8x32xf32>
    %83 = arith.addf %81, %82 : vector<8x32xf32>
    %84 = math.tanh %83 : vector<8x32xf32>
    %85 = vector.extract_strided_slice %58 {offsets = [56, 0], sizes = [8, 32], strides = [1, 1]} : vector<64x32xf32> to vector<8x32xf32>
    %cst_35 = arith.constant dense<0.000000e+00> : vector<8x32xf32>
    %86 = tpu.matmul %84, %54, %cst_35 {dimension_numbers = #tpu.dot_dimension_numbers<[1], [0], [0], [1], [0, 0, 1, 1], [], []>} : vector<8x32xf32>, vector<32x32xf32>, vector<8x32xf32> -> vector<8x32xf32>
    %87 = arith.addf %85, %86 : vector<8x32xf32>
    %88 = math.tanh %87 : vector<8x32xf32>
    %cst_36 = arith.constant dense<0.000000e+00> : vector<8xf32>
    %89 = vector.multi_reduction <add>, %88, %cst_36 [1] : vector<8x32xf32> to vector<8xf32>
    %90 = vector.shape_cast %89 : vector<8xf32> to vector<8x1xf32>
    %cst_37 = arith.constant 3.200000e+01 : f32
    %91 = vector.broadcast %cst_37 : f32 to vector<8x1xf32>
    %92 = arith.divf %90, %91 : vector<8x1xf32>
    %93 = vector.broadcast %92 : vector<8x1xf32> to vector<8x32xf32>
    %94 = arith.subf %88, %93 : vector<8x32xf32>
    %95 = arith.mulf %94, %94 : vector<8x32xf32>
    %cst_38 = arith.constant dense<0.000000e+00> : vector<8xf32>
    %96 = vector.multi_reduction <add>, %95, %cst_38 [1] : vector<8x32xf32> to vector<8xf32>
    %97 = vector.shape_cast %96 : vector<8xf32> to vector<8x1xf32>
    %cst_39 = arith.constant 3.200000e+01 : f32
    %98 = vector.broadcast %cst_39 : f32 to vector<8x1xf32>
    %99 = arith.divf %97, %98 : vector<8x1xf32>
    %c272 = arith.constant 272 : index
    %c0_40 = arith.constant 0 : index
    %100 = vector.load %arg2[%c272, %c0_40] : memref<328x32xf32, #tpu.memory_space<vmem>>, vector<1x32xf32>
    %c280 = arith.constant 280 : index
    %c0_41 = arith.constant 0 : index
    %101 = vector.load %arg2[%c280, %c0_41] : memref<328x32xf32, #tpu.memory_space<vmem>>, vector<1x32xf32>
    %cst_42 = arith.constant 9.99999974E-6 : f32
    %102 = vector.broadcast %cst_42 : f32 to vector<8x1xf32>
    %103 = arith.addf %99, %102 : vector<8x1xf32>
    %104 = math.rsqrt %103 : vector<8x1xf32>
    %105 = vector.broadcast %104 : vector<8x1xf32> to vector<8x32xf32>
    %106 = arith.mulf %94, %105 : vector<8x32xf32>
    %107 = vector.broadcast %100 : vector<1x32xf32> to vector<8x32xf32>
    %108 = arith.mulf %106, %107 : vector<8x32xf32>
    %109 = vector.broadcast %101 : vector<1x32xf32> to vector<8x32xf32>
    %110 = arith.addf %108, %109 : vector<8x32xf32>
    %c288 = arith.constant 288 : index
    %c0_43 = arith.constant 0 : index
    %111 = vector.load %arg2[%c288, %c0_43] : memref<328x32xf32, #tpu.memory_space<vmem>>, vector<32x32xf32>
    %c320 = arith.constant 320 : index
    %c0_44 = arith.constant 0 : index
    %112 = vector.load %arg2[%c320, %c0_44] : memref<328x32xf32, #tpu.memory_space<vmem>>, vector<1x32xf32>
    %cst_45 = arith.constant dense<0.000000e+00> : vector<8x32xf32>
    %113 = tpu.matmul %110, %111, %cst_45 {dimension_numbers = #tpu.dot_dimension_numbers<[1], [0], [0], [1], [0, 0, 1, 1], [], []>} : vector<8x32xf32>, vector<32x32xf32>, vector<8x32xf32> -> vector<8x32xf32>
    %114 = vector.broadcast %112 : vector<1x32xf32> to vector<8x32xf32>
    %115 = arith.addf %113, %114 : vector<8x32xf32>
    %cst_46 = arith.constant 0.000000e+00 : f32
    %116 = vector.broadcast %cst_46 : f32 to vector<8x32xf32>
    %117 = arith.maximumf %115, %116 : vector<8x32xf32>
    %c0_47 = arith.constant 0 : index
    %c0_48 = arith.constant 0 : index
    %118 = vector.load %arg3[%c0_47, %c0_48] : memref<40x128xf32, #tpu.memory_space<vmem>>, vector<32x128xf32>
    %c32_49 = arith.constant 32 : index
    %c0_50 = arith.constant 0 : index
    %119 = vector.load %arg3[%c32_49, %c0_50] : memref<40x128xf32, #tpu.memory_space<vmem>>, vector<1x128xf32>
    %cst_51 = arith.constant dense<0.000000e+00> : vector<8x128xf32>
    %120 = tpu.matmul %117, %118, %cst_51 {dimension_numbers = #tpu.dot_dimension_numbers<[1], [0], [0], [1], [0, 0, 1, 1], [], []>} : vector<8x32xf32>, vector<32x128xf32>, vector<8x128xf32> -> vector<8x128xf32>
    %121 = vector.broadcast %119 : vector<1x128xf32> to vector<8x128xf32>
    %122 = arith.addf %120, %121 : vector<8x128xf32>
    %c0_52 = arith.constant 0 : index
    %c0_53 = arith.constant 0 : index
    %123 = vector.load %arg4[%c0_52, %c0_53] : memref<8x128xf32, #tpu.memory_space<vmem>>, vector<8x128xf32>
    tpu.vector_store %arg4[%c0_52, %c0_53], %122 {strides = array<i32>} : memref<8x128xf32, #tpu.memory_space<vmem>>, vector<8x128xf32>,
    return
  }
  func.func @transform_0(%arg0: i32) -> (i32, i32) {
    %c0_i32 = arith.constant 0 : i32
    %c0_i32_0 = arith.constant 0 : i32
    %c0_i32_1 = arith.constant 0 : i32
    return %c0_i32, %c0_i32_0 : i32, i32
  }
  func.func @transform_1(%arg0: i32) -> (i32, i32) {
    %c0_i32 = arith.constant 0 : i32
    %c0_i32_0 = arith.constant 0 : i32
    %c0_i32_1 = arith.constant 0 : i32
    return %c0_i32, %c0_i32_0 : i32, i32
  }
  func.func @transform_2(%arg0: i32) -> (i32, i32) {
    %c0_i32 = arith.constant 0 : i32
    %c0_i32_0 = arith.constant 0 : i32
    %c0_i32_1 = arith.constant 0 : i32
    return %c0_i32, %c0_i32_0 : i32, i32
  }
  func.func @transform_3(%arg0: i32) -> (i32, i32) {
    %c0_i32 = arith.constant 0 : i32
    %c0_i32_0 = arith.constant 0 : i32
    %c0_i32_1 = arith.constant 0 : i32
    return %c0_i32, %c0_i32_0 : i32, i32
  }
}

</mosaic_0001>

<llo_original>
// kernel: tpu_custom_call.1
$region0: #{tpu_custom_call.1}
  #allocation0 [shape = 'u32[]', space=smem, size = 0x4, offset = 0x4, fixed_abs, tag = 'smem constant byte address 0x4 - core index']
  #allocation1 [shape = 'u32[144,128]{1,0:T(1,128)}', space=vmem, size = 0x12000, scoped, tag = 'internal scratch']
  #allocation2 [shape = 'f32[64,32]{1,0:T(8,128)}', space=vmem, size = 0x8000, scoped, tag = 'scratch operand']
  %s0 = inlined_call_operand.vmem [shape: s32[64,1], index: 0, kind: input, shape index: {}]
  %s1 = inlined_call_operand.vmem [shape: f32[328,32], index: 1, kind: input, shape index: {}]
  %s2 = inlined_call_operand.vmem [shape: f32[40,128], index: 2, kind: input, shape index: {}]
  %s3 = inlined_call_operand.hbm [shape: f32[8,128], index: 3, kind: output, shape index: {}]
  %s4 = sld [smem:[#allocation0]]
  $region22: #{tpu_custom_call.1} parent=0
    _
  %s6 = ssub.s32 1, %s4
  %s7 = scalar_select 0, %s6, %s4
  $region1: #{tpu_custom_call.1} parent=0
    #allocation3 [shape = 'u8[4096]{0}', space=vmem, size = 0x1000, scoped, tag = 'output window, operand 0, single buffered']
    #allocation4 [shape = 's32[1]{0}', space=sflag, size = 0x4, scoped, tag = 'scoped memory for tpu_custom_call.1']
    %8 = vsyncpa [#allocation4], 0
    // Predicated region
    $region2: #{tpu_custom_call.1} parent=1 // pred_check
      _
    $region3: #{tpu_custom_call.1} parent=1 // pred_check_branch
      %10 = sbr.rel (0) target = $region5
    $region4: #{tpu_custom_call.1} parent=1 // pred_region
      _
    $region5: #{tpu_custom_call.1} parent=1 // pred_fallthru
      _
    // Predicated region
    $region6: #{tpu_custom_call.1} parent=1 // pred_check
      _
    $region7: #{tpu_custom_call.1} parent=1 // pred_check_branch
      %12 = sbr.rel (0) target = $region9
    $region8: #{tpu_custom_call.1} parent=1 // pred_region
      _
    $region9: #{tpu_custom_call.1} parent=1 // pred_fallthru
      _
    // Predicated region
    $region10: #{tpu_custom_call.1} parent=1 // pred_check
      _
    $region11: #{tpu_custom_call.1} parent=1 // pred_check_branch
      %14 = sbr.rel (0) target = $region13
    $region12: #{tpu_custom_call.1} parent=1 // pred_region
      _
    $region13: #{tpu_custom_call.1} parent=1 // pred_fallthru
      _
    %v15 = vld [vmem:[%s0] sm:$0xff]
    %v16 = vld [vmem:[%s0 + $0x8] sm:$0xff]
    %v17 = vld [vmem:[%s0 + $0x10] sm:$0xff]
    %v18 = vld [vmem:[%s0 + $0x18] sm:$0xff]
    %v19 = vld [vmem:[%s0 + $0x20] sm:$0xff]
    %v20 = vld [vmem:[%s0 + $0x28] sm:$0xff]
    %v21 = vld [vmem:[%s0 + $0x30] sm:$0xff]
    %v22 = vld [vmem:[%s0 + $0x38] sm:$0xff]
    %v23 = vlaneseq
    %v24 = vand.u32 %v23, 127
    %25 = vset.pattern.permute.xlu0 0
    %26 = vperm.xlu0 %25, %v15
    %v27 = vpop.permute.xlu0 %26
    %28 = vset.pattern.permute.xlu0 0
    %29 = vperm.xlu0 %28, %v16
    %v30 = vpop.permute.xlu0 %29
    %31 = vset.pattern.permute.xlu0 0
    %32 = vperm.xlu0 %31, %v17
    %v33 = vpop.permute.xlu0 %32
    %34 = vset.pattern.permute.xlu0 0
    %35 = vperm.xlu0 %34, %v18
    %v36 = vpop.permute.xlu0 %35
    %37 = vset.pattern.permute.xlu0 0
    %38 = vperm.xlu0 %37, %v19
    %v39 = vpop.permute.xlu0 %38
    %40 = vset.pattern.permute.xlu0 0
    %41 = vperm.xlu0 %40, %v20
    %v42 = vpop.permute.xlu0 %41
    %43 = vset.pattern.permute.xlu0 0
    %44 = vperm.xlu0 %43, %v21
    %v45 = vpop.permute.xlu0 %44
    %46 = vset.pattern.permute.xlu0 0
    %47 = vperm.xlu0 %46, %v22
    %v48 = vpop.permute.xlu0 %47
    %vm49 = vcmp.eq.s32.totalorder %v24, %v27
    %vm50 = vcmp.eq.s32.totalorder %v24, %v30
    %vm51 = vcmp.eq.s32.totalorder %v24, %v33
    %vm52 = vcmp.eq.s32.totalorder %v24, %v36
    %vm53 = vcmp.eq.s32.totalorder %v24, %v39
    %vm54 = vcmp.eq.s32.totalorder %v24, %v42
    %vm55 = vcmp.eq.s32.totalorder %v24, %v45
    %vm56 = vcmp.eq.s32.totalorder %v24, %v48
    %v57 = vsel %vm49, 1, 0
    %v58 = vsel %vm50, 1, 0
    %v59 = vsel %vm51, 1, 0
    %v60 = vsel %vm52, 1, 0
    %v61 = vsel %vm53, 1, 0
    %v62 = vsel %vm54, 1, 0
    %v63 = vsel %vm55, 1, 0
    %v64 = vsel %vm56, 1, 0
    %v65 = vcvt.s32.f32 %v57
    %v66 = vcvt.s32.f32 %v58
    %v67 = vcvt.s32.f32 %v59
    %v68 = vcvt.s32.f32 %v60
    %v69 = vcvt.s32.f32 %v61
    %v70 = vcvt.s32.f32 %v62
    %v71 = vcvt.s32.f32 %v63
    %v72 = vcvt.s32.f32 %v64
    %v73 = vld [vmem:[%s1] sm:$0xff]
    %v74 = vld [vmem:[%s1 + $0x8] sm:$0xff]
    %v75 = vld [vmem:[%s1 + $0x10] sm:$0xff]
    %v76 = vld [vmem:[%s1 + $0x18] sm:$0xff]
    %v77 = vld [vmem:[%s1 + $0x20] sm:$0xff]
    %v78 = vld [vmem:[%s1 + $0x28] sm:$0xff]
    %v79 = vld [vmem:[%s1 + $0x30] sm:$0xff]
    %v80 = vld [vmem:[%s1 + $0x38] sm:$0xff]
    %v81 = vld [vmem:[%s1 + $0x40] sm:$0xff]
    %v82 = vld [vmem:[%s1 + $0x48] sm:$0xff]
    %v83 = vld [vmem:[%s1 + $0x50] sm:$0xff]
    %v84 = vld [vmem:[%s1 + $0x58] sm:$0xff]
    %v85 = vld [vmem:[%s1 + $0x60] sm:$0xff]
    %v86 = vld [vmem:[%s1 + $0x68] sm:$0xff]
    %v87 = vld [vmem:[%s1 + $0x70] sm:$0xff]
    %v88 = vld [vmem:[%s1 + $0x78] sm:$0xff]
    %89 = vmatprep.subr.mxu0 0.0
    %90 = vmatpush1.msra.mxu0 %v73
    %91 = vmatprep.subr.mxu0 0.0
    %92 = vmatpush1.msra.mxu0 %v74
    %93 = vmatprep.subr.mxu0 0.0
    %94 = vmatpush1.msra.mxu0 %v75
    %95 = vmatprep.subr.mxu0 0.0
    %96 = vmatpush1.msra.mxu0 %v76
    %97 = vmatprep.subr.mxu0 0.0
    %98 = vmatpush1.msra.mxu0 %v77
    %99 = vmatprep.subr.mxu0 0.0
    %100 = vmatpush1.msra.mxu0 %v78
    %101 = vmatprep.subr.mxu0 0.0
    %102 = vmatpush1.msra.mxu0 %v79
    %103 = vmatprep.subr.mxu0 0.0
    %104 = vmatpush1.msra.mxu0 %v80
    %105 = vmatprep.subr.mxu0 0.0
    %106 = vmatpush1.msra.mxu0 %v81
    %107 = vmatprep.subr.mxu0 0.0
    %108 = vmatpush1.msra.mxu0 %v82
    %109 = vmatprep.subr.mxu0 0.0
    %110 = vmatpush1.msra.mxu0 %v83
    %111 = vmatprep.subr.mxu0 0.0
    %112 = vmatpush1.msra.mxu0 %v84
    %113 = vmatprep.subr.mxu0 0.0
    %114 = vmatpush1.msra.mxu0 %v85
    %115 = vmatprep.subr.mxu0 0.0
    %116 = vmatpush1.msra.mxu0 %v86
    %117 = vmatprep.subr.mxu0 0.0
    %118 = vmatpush1.msra.mxu0 %v87
    %119 = vmatprep.subr.mxu0 0.0
    %120 = vmatpush1.msra.mxu0 %v88
    %121 = vmatprep.subr.mxu0 0.0
    %122 = vmatpush1.msra.mxu0 0.0
    %123 = vmatprep.subr.mxu0 0.0
    %124 = vmatpush1.msra.mxu0 0.0
    %125 = vmatprep.subr.mxu0 0.0
    %126 = vmatpush1.msra.mxu0 0.0
    %127 = vmatprep.subr.mxu0 0.0
    %128 = vmatpush1.msra.mxu0 0.0
    %129 = vmatprep.subr.mxu0 0.0
    %130 = vmatpush1.msra.mxu0 0.0
    %131 = vmatprep.subr.mxu0 0.0
    %132 = vmatpush1.msra.mxu0 0.0
    %133 = vmatprep.subr.mxu0 0.0
    %134 = vmatpush1.msra.mxu0 0.0
    %135 = vmatprep.subr.mxu0 0.0
    %136 = vmatpush1.msra.mxu0 0.0
    %137 = vmatprep.subr.mxu0 0.0
    %138 = vmatpush1.msra.mxu0 0.0
    %139 = vmatprep.subr.mxu0 0.0
    %140 = vmatpush1.msra.mxu0 0.0
    %141 = vmatprep.subr.mxu0 0.0
    %142 = vmatpush1.msra.mxu0 0.0
    %143 = vmatprep.subr.mxu0 0.0
    %144 = vmatpush1.msra.mxu0 0.0
    %145 = vmatprep.subr.mxu0 0.0
    %146 = vmatpush1.msra.mxu0 0.0
    %147 = vmatprep.subr.mxu0 0.0
    %148 = vmatpush1.msra.mxu0 0.0
    %149 = vmatprep.subr.mxu0 0.0
    %150 = vmatpush1.msra.mxu0 0.0
    %151 = vmatprep.subr.mxu0 0.0
    %152 = vmatpush1.msra.mxu0 0.0
    %153 = vmatprep.mubr.f32.mxu0 0.0
    %154 = vmatmul.mubr.f32.gmra.mrb[0].mxu0 %v65
    %v155 = vpop.f32.mrb[0].mxu0
    %v156 = vadd.f32 0.0, %v155
    %v157 = vpop.f32.mrb[0].mxu0
    %158 = vmatprep.mubr.f32.mxu0 0.0
    %159 = vmatmul.mubr.f32.gmra.mrb[0].mxu0 %v66
    %v160 = vpop.f32.mrb[0].mxu0
    %v161 = vadd.f32 0.0, %v160
    %v162 = vpop.f32.mrb[0].mxu0
    %163 = vmatprep.mubr.f32.mxu0 0.0
    %164 = vmatmul.mubr.f32.gmra.mrb[0].mxu0 %v67
    %v165 = vpop.f32.mrb[0].mxu0
    %v166 = vadd.f32 0.0, %v165
    %v167 = vpop.f32.mrb[0].mxu0
    %168 = vmatprep.mubr.f32.mxu0 0.0
    %169 = vmatmul.mubr.f32.gmra.mrb[0].mxu0 %v68
    %v170 = vpop.f32.mrb[0].mxu0
    %v171 = vadd.f32 0.0, %v170
    %v172 = vpop.f32.mrb[0].mxu0
    %173 = vmatprep.mubr.f32.mxu0 0.0
    %174 = vmatmul.mubr.f32.gmra.mrb[0].mxu0 %v69
    %v175 = vpop.f32.mrb[0].mxu0
    %v176 = vadd.f32 0.0, %v175
    %v177 = vpop.f32.mrb[0].mxu0
    %178 = vmatprep.mubr.f32.mxu0 0.0
    %179 = vmatmul.mubr.f32.gmra.mrb[0].mxu0 %v70
    %v180 = vpop.f32.mrb[0].mxu0
    %v181 = vadd.f32 0.0, %v180
    %v182 = vpop.f32.mrb[0].mxu0
    %183 = vmatprep.mubr.f32.mxu0 0.0
    %184 = vmatmul.mubr.f32.gmra.mrb[0].mxu0 %v71
    %v185 = vpop.f32.mrb[0].mxu0
    %v186 = vadd.f32 0.0, %v185
    %v187 = vpop.f32.mrb[0].mxu0
    %188 = vmatprep.mubr.f32.mxu0 0.0
    %189 = vmatmul.mubr.f32.gmra.mrb[0].mxu0 %v72
    %v190 = vpop.f32.mrb[0].mxu0
    %v191 = vadd.f32 0.0, %v190
    %v192 = vpop.f32.mrb[0].mxu0
    %193 = vdwg.mxu0
    %v194 = vld [vmem:[%s1 + $0x80] sm:$0xff]
    %v195 = vld [vmem:[%s1 + $0x88] sm:$0xff]
    %v196 = vld [vmem:[%s1 + $0x90] sm:$0xff]
    %v197 = vld [vmem:[%s1 + $0x98] sm:$0xff]
    %v198 = vld [vmem:[%s1 + $0xa0] sm:$0xff]
    %v199 = vld [vmem:[%s1 + $0xa8] sm:$0xff]
    %v200 = vld [vmem:[%s1 + $0xb0] sm:$0xff]
    %v201 = vld [vmem:[%s1 + $0xb8] sm:$0xff]
    %v202 = vld [vmem:[%s1 + $0xc0] sm:$0x1]
    %v203 = vlaneseq
    %v204 = vshrl.u32 %v203, 7
    %v205 = vsub.s32 0, %v204
    %v206 = vrot.slane %v202, %v205
    %vm207 = vcmask 261120
    %v209 = vsel %vm207, %v156, 0
    %v212 = vsel %vm207, %v161, 0
    %v215 = vsel %vm207, %v166, 0
    %v218 = vsel %vm207, %v171, 0
    %v221 = vsel %vm207, %v176, 0
    %v224 = vsel %vm207, %v181, 0
    %v227 = vsel %vm207, %v186, 0
    %v230 = vsel %vm207, %v191, 0
    %232 = vmatprep.subr.mxu0 0.0
    %233 = vmatpush1.msra.mxu0 %v194
    %234 = vmatprep.subr.mxu0 0.0
    %235 = vmatpush1.msra.mxu0 %v195
    %236 = vmatprep.subr.mxu0 0.0
    %237 = vmatpush1.msra.mxu0 %v196
    %238 = vmatprep.subr.mxu0 0.0
    %239 = vmatpush1.msra.mxu0 %v197
    %240 = vmatprep.subr.mxu0 0.0
    %241 = vmatpush1.msra.mxu0 0.0
    %242 = vmatprep.subr.mxu0 0.0
    %243 = vmatpush1.msra.mxu0 0.0
    %244 = vmatprep.subr.mxu0 0.0
    %245 = vmatpush1.msra.mxu0 0.0
    %246 = vmatprep.subr.mxu0 0.0
    %247 = vmatpush1.msra.mxu0 0.0
    %248 = vmatprep.subr.mxu0 0.0
    %249 = vmatpush1.msra.mxu0 0.0
    %250 = vmatprep.subr.mxu0 0.0
    %251 = vmatpush1.msra.mxu0 0.0
    %252 = vmatprep.subr.mxu0 0.0
    %253 = vmatpush1.msra.mxu0 0.0
    %254 = vmatprep.subr.mxu0 0.0
    %255 = vmatpush1.msra.mxu0 0.0
    %256 = vmatprep.subr.mxu0 0.0
    %257 = vmatpush1.msra.mxu0 0.0
    %258 = vmatprep.subr.mxu0 0.0
    %259 = vmatpush1.msra.mxu0 0.0
    %260 = vmatprep.subr.mxu0 0.0
    %261 = vmatpush1.msra.mxu0 0.0
    %262 = vmatprep.subr.mxu0 0.0
    %263 = vmatpush1.msra.mxu0 0.0
    %264 = vmatprep.subr.mxu0 0.0
    %265 = vmatpush1.msra.mxu0 0.0
    %266 = vmatprep.subr.mxu0 0.0
    %267 = vmatpush1.msra.mxu0 0.0
    %268 = vmatprep.subr.mxu0 0.0
    %269 = vmatpush1.msra.mxu0 0.0
    %270 = vmatprep.subr.mxu0 0.0
    %271 = vmatpush1.msra.mxu0 0.0
    %272 = vmatprep.subr.mxu0 0.0
    %273 = vmatpush1.msra.mxu0 0.0
    %274 = vmatprep.subr.mxu0 0.0
    %275 = vmatpush1.msra.mxu0 0.0
    %276 = vmatprep.subr.mxu0 0.0
    %277 = vmatpush1.msra.mxu0 0.0
    %278 = vmatprep.subr.mxu0 0.0
    %279 = vmatpush1.msra.mxu0 0.0
    %280 = vmatprep.subr.mxu0 0.0
    %281 = vmatpush1.msra.mxu0 0.0
    %282 = vmatprep.subr.mxu0 0.0
    %283 = vmatpush1.msra.mxu0 0.0
    %284 = vmatprep.subr.mxu0 0.0
    %285 = vmatpush1.msra.mxu0 0.0
    %286 = vmatprep.subr.mxu0 0.0
    %287 = vmatpush1.msra.mxu0 0.0
    %288 = vmatprep.subr.mxu0 0.0
    %289 = vmatpush1.msra.mxu0 0.0
    %290 = vmatprep.subr.mxu0 0.0
    %291 = vmatpush1.msra.mxu0 0.0
    %292 = vmatprep.subr.mxu0 0.0
    %293 = vmatpush1.msra.mxu0 0.0
    %294 = vmatprep.subr.mxu0 0.0
    %295 = vmatpush1.msra.mxu0 0.0
    %296 = vmatprep.mubr.f32.mxu0 0.0
    %297 = vmatmul.mubr.f32.gmra.mrb[0].mxu0 %v209
    %v298 = vpop.f32.mrb[0].mxu0
    %v299 = vadd.f32 %v206, %v298
    %v300 = vpop.f32.mrb[0].mxu0
    %301 = vmatprep.mubr.f32.mxu0 0.0
    %302 = vmatmul.mubr.f32.gmra.mrb[0].mxu0 %v212
    %v303 = vpop.f32.mrb[0].mxu0
    %v304 = vadd.f32 %v206, %v303
    %v305 = vpop.f32.mrb[0].mxu0
    %306 = vmatprep.mubr.f32.mxu0 0.0
    %307 = vmatmul.mubr.f32.gmra.mrb[0].mxu0 %v215
    %v308 = vpop.f32.mrb[0].mxu0
    %v309 = vadd.f32 %v206, %v308
    %v310 = vpop.f32.mrb[0].mxu0
    %311 = vmatprep.mubr.f32.mxu0 0.0
    %312 = vmatmul.mubr.f32.gmra.mrb[0].mxu0 %v218
    %v313 = vpop.f32.mrb[0].mxu0
    %v314 = vadd.f32 %v206, %v313
    %v315 = vpop.f32.mrb[0].mxu0
    %316 = vmatprep.mubr.f32.mxu0 0.0
    %317 = vmatmul.mubr.f32.gmra.mrb[0].mxu0 %v221
    %v318 = vpop.f32.mrb[0].mxu0
    %v319 = vadd.f32 %v206, %v318
    %v320 = vpop.f32.mrb[0].mxu0
    %321 = vmatprep.mubr.f32.mxu0 0.0
    %322 = vmatmul.mubr.f32.gmra.mrb[0].mxu0 %v224
    %v323 = vpop.f32.mrb[0].mxu0
    %v324 = vadd.f32 %v206, %v323
    %v325 = vpop.f32.mrb[0].mxu0
    %326 = vmatprep.mubr.f32.mxu0 0.0
    %327 = vmatmul.mubr.f32.gmra.mrb[0].mxu0 %v227
    %v328 = vpop.f32.mrb[0].mxu0
    %v329 = vadd.f32 %v206, %v328
    %v330 = vpop.f32.mrb[0].mxu0
    %331 = vmatprep.mubr.f32.mxu0 0.0
    %332 = vmatmul.mubr.f32.gmra.mrb[0].mxu0 %v230
    %v333 = vpop.f32.mrb[0].mxu0
    %v334 = vadd.f32 %v206, %v333
    %v335 = vpop.f32.mrb[0].mxu0
    %336 = vdwg.mxu0
    %v337 = vtanh.pop %v299
    %338 = vst.msk [vmem:[#allocation2] sm:$0xff] %vm207, %v337
    %v340 = vsel %vm207, %v337, 0
    %342 = vmatprep.subr.mxu0 0.0
    %343 = vmatpush1.msra.mxu0 %v198
    %344 = vmatprep.subr.mxu0 0.0
    %345 = vmatpush1.msra.mxu0 %v199
    %346 = vmatprep.subr.mxu0 0.0
    %347 = vmatpush1.msra.mxu0 %v200
    %348 = vmatprep.subr.mxu0 0.0
    %349 = vmatpush1.msra.mxu0 %v201
    %350 = vmatprep.subr.mxu0 0.0
    %351 = vmatpush1.msra.mxu0 0.0
    %352 = vmatprep.subr.mxu0 0.0
    %353 = vmatpush1.msra.mxu0 0.0
    %354 = vmatprep.subr.mxu0 0.0
    %355 = vmatpush1.msra.mxu0 0.0
    %356 = vmatprep.subr.mxu0 0.0
    %357 = vmatpush1.msra.mxu0 0.0
    %358 = vmatprep.subr.mxu0 0.0
    %359 = vmatpush1.msra.mxu0 0.0
    %360 = vmatprep.subr.mxu0 0.0
    %361 = vmatpush1.msra.mxu0 0.0
    %362 = vmatprep.subr.mxu0 0.0
    %363 = vmatpush1.msra.mxu0 0.0
    %364 = vmatprep.subr.mxu0 0.0
    %365 = vmatpush1.msra.mxu0 0.0
    %366 = vmatprep.subr.mxu0 0.0
    %367 = vmatpush1.msra.mxu0 0.0
    %368 = vmatprep.subr.mxu0 0.0
    %369 = vmatpush1.msra.mxu0 0.0
    %370 = vmatprep.subr.mxu0 0.0
    %371 = vmatpush1.msra.mxu0 0.0
    %372 = vmatprep.subr.mxu0 0.0
    %373 = vmatpush1.msra.mxu0 0.0
    %374 = vmatprep.subr.mxu0 0.0
    %375 = vmatpush1.msra.mxu0 0.0
    %376 = vmatprep.subr.mxu0 0.0
    %377 = vmatpush1.msra.mxu0 0.0
    %378 = vmatprep.subr.mxu0 0.0
    %379 = vmatpush1.msra.mxu0 0.0
    %380 = vmatprep.subr.mxu0 0.0
    %381 = vmatpush1.msra.mxu0 0.0
    %382 = vmatprep.subr.mxu0 0.0
    %383 = vmatpush1.msra.mxu0 0.0
    %384 = vmatprep.subr.mxu0 0.0
    %385 = vmatpush1.msra.mxu0 0.0
    %386 = vmatprep.subr.mxu0 0.0
    %387 = vmatpush1.msra.mxu0 0.0
    %388 = vmatprep.subr.mxu0 0.0
    %389 = vmatpush1.msra.mxu0 0.0
    %390 = vmatprep.subr.mxu0 0.0
    %391 = vmatpush1.msra.mxu0 0.0
    %392 = vmatprep.subr.mxu0 0.0
    %393 = vmatpush1.msra.mxu0 0.0
    %394 = vmatprep.subr.mxu0 0.0
    %395 = vmatpush1.msra.mxu0 0.0
    %396 = vmatprep.subr.mxu0 0.0
    %397 = vmatpush1.msra.mxu0 0.0
    %398 = vmatprep.subr.mxu0 0.0
    %399 = vmatpush1.msra.mxu0 0.0
    %400 = vmatprep.subr.mxu0 0.0
    %401 = vmatpush1.msra.mxu0 0.0
    %402 = vmatprep.subr.mxu0 0.0
    %403 = vmatpush1.msra.mxu0 0.0
    %404 = vmatprep.subr.mxu0 0.0
    %405 = vmatpush1.msra.mxu0 0.0
    %406 = vmatprep.mubr.f32.mxu0 0.0
    %407 = vmatmul.mubr.f32.gmra.mrb[0].mxu0 %v340
    %v408 = vpop.f32.mrb[0].mxu0
    %v409 = vadd.f32 0.0, %v408
    %v410 = vpop.f32.mrb[0].mxu0
    %411 = vdwg.mxu0
    %v412 = vadd.f32 %v304, %v409
    %v413 = vtanh.pop %v412
    %414 = vst.msk [vmem:[#allocation2 + $0x8] sm:$0xff] %vm207, %v413
    %v416 = vsel %vm207, %v413, 0
    %418 = vmatprep.subr.mxu0 0.0
    %419 = vmatpush1.msra.mxu0 %v198
    %420 = vmatprep.subr.mxu0 0.0
    %421 = vmatpush1.msra.mxu0 %v199
    %422 = vmatprep.subr.mxu0 0.0
    %423 = vmatpush1.msra.mxu0 %v200
    %424 = vmatprep.subr.mxu0 0.0
    %425 = vmatpush1.msra.mxu0 %v201
    %426 = vmatprep.subr.mxu0 0.0
    %427 = vmatpush1.msra.mxu0 0.0
    %428 = vmatprep.subr.mxu0 0.0
    %429 = vmatpush1.msra.mxu0 0.0
    %430 = vmatprep.subr.mxu0 0.0
    %431 = vmatpush1.msra.mxu0 0.0
    %432 = vmatprep.subr.mxu0 0.0
    %433 = vmatpush1.msra.mxu0 0.0
    %434 = vmatprep.subr.mxu0 0.0
    %435 = vmatpush1.msra.mxu0 0.0
    %436 = vmatprep.subr.mxu0 0.0
    %437 = vmatpush1.msra.mxu0 0.0
    %438 = vmatprep.subr.mxu0 0.0
    %439 = vmatpush1.msra.mxu0 0.0
    %440 = vmatprep.subr.mxu0 0.0
    %441 = vmatpush1.msra.mxu0 0.0
    %442 = vmatprep.subr.mxu0 0.0
    %443 = vmatpush1.msra.mxu0 0.0
    %444 = vmatprep.subr.mxu0 0.0
    %445 = vmatpush1.msra.mxu0 0.0
    %446 = vmatprep.subr.mxu0 0.0
    %447 = vmatpush1.msra.mxu0 0.0
    %448 = vmatprep.subr.mxu0 0.0
    %449 = vmatpush1.msra.mxu0 0.0
    %450 = vmatprep.subr.mxu0 0.0
    %451 = vmatpush1.msra.mxu0 0.0
    %452 = vmatprep.subr.mxu0 0.0
    %453 = vmatpush1.msra.mxu0 0.0
    %454 = vmatprep.subr.mxu0 0.0
    %455 = vmatpush1.msra.mxu0 0.0
    %456 = vmatprep.subr.mxu0 0.0
    %457 = vmatpush1.msra.mxu0 0.0
    %458 = vmatprep.subr.mxu0 0.0
    %459 = vmatpush1.msra.mxu0 0.0
    %460 = vmatprep.subr.mxu0 0.0
    %461 = vmatpush1.msra.mxu0 0.0
    %462 = vmatprep.subr.mxu0 0.0
    %463 = vmatpush1.msra.mxu0 0.0
    %464 = vmatprep.subr.mxu0 0.0
    %465 = vmatpush1.msra.mxu0 0.0
    %466 = vmatprep.subr.mxu0 0.0
    %467 = vmatpush1.msra.mxu0 0.0
    %468 = vmatprep.subr.mxu0 0.0
    %469 = vmatpush1.msra.mxu0 0.0
    %470 = vmatprep.subr.mxu0 0.0
    %471 = vmatpush1.msra.mxu0 0.0
    %472 = vmatprep.subr.mxu0 0.0
    %473 = vmatpush1.msra.mxu0 0.0
    %474 = vmatprep.subr.mxu0 0.0
    %475 = vmatpush1.msra.mxu0 0.0
    %476 = vmatprep.subr.mxu0 0.0
    %477 = vmatpush1.msra.mxu0 0.0
    %478 = vmatprep.subr.mxu0 0.0
    %479 = vmatpush1.msra.mxu0 0.0
    %480 = vmatprep.subr.mxu0 0.0
    %481 = vmatpush1.msra.mxu0 0.0
    %482 = vmatprep.mubr.f32.mxu0 0.0
    %483 = vmatmul.mubr.f32.gmra.mrb[0].mxu0 %v416
    %v484 = vpop.f32.mrb[0].mxu0
    %v485 = vadd.f32 0.0, %v484
    %v486 = vpop.f32.mrb[0].mxu0
    %487 = vdwg.mxu0
    %v488 = vadd.f32 %v309, %v485
    %v489 = vtanh.pop %v488
    %490 = vst.msk [vmem:[#allocation2 + $0x10] sm:$0xff] %vm207, %v489
    %v492 = vsel %vm207, %v489, 0
    %494 = vmatprep.subr.mxu0 0.0
    %495 = vmatpush1.msra.mxu0 %v198
    %496 = vmatprep.subr.mxu0 0.0
    %497 = vmatpush1.msra.mxu0 %v199
    %498 = vmatprep.subr.mxu0 0.0
    %499 = vmatpush1.msra.mxu0 %v200
    %500 = vmatprep.subr.mxu0 0.0
    %501 = vmatpush1.msra.mxu0 %v201
    %502 = vmatprep.subr.mxu0 0.0
    %503 = vmatpush1.msra.mxu0 0.0
    %504 = vmatprep.subr.mxu0 0.0
    %505 = vmatpush1.msra.mxu0 0.0
    %506 = vmatprep.subr.mxu0 0.0
    %507 = vmatpush1.msra.mxu0 0.0
    %508 = vmatprep.subr.mxu0 0.0
    %509 = vmatpush1.msra.mxu0 0.0
    %510 = vmatprep.subr.mxu0 0.0
    %511 = vmatpush1.msra.mxu0 0.0
    %512 = vmatprep.subr.mxu0 0.0
    %513 = vmatpush1.msra.mxu0 0.0
    %514 = vmatprep.subr.mxu0 0.0
    %515 = vmatpush1.msra.mxu0 0.0
    %516 = vmatprep.subr.mxu0 0.0
    %517 = vmatpush1.msra.mxu0 0.0
    %518 = vmatprep.subr.mxu0 0.0
    %519 = vmatpush1.msra.mxu0 0.0
    %520 = vmatprep.subr.mxu0 0.0
    %521 = vmatpush1.msra.mxu0 0.0
    %522 = vmatprep.subr.mxu0 0.0
    %523 = vmatpush1.msra.mxu0 0.0
    %524 = vmatprep.subr.mxu0 0.0
    %525 = vmatpush1.msra.mxu0 0.0
    %526 = vmatprep.subr.mxu0 0.0
    %527 = vmatpush1.msra.mxu0 0.0
    %528 = vmatprep.subr.mxu0 0.0
    %529 = vmatpush1.msra.mxu0 0.0
    %530 = vmatprep.subr.mxu0 0.0
    %531 = vmatpush1.msra.mxu0 0.0
    %532 = vmatprep.subr.mxu0 0.0
    %533 = vmatpush1.msra.mxu0 0.0
    %534 = vmatprep.subr.mxu0 0.0
    %535 = vmatpush1.msra.mxu0 0.0
    %536 = vmatprep.subr.mxu0 0.0
    %537 = vmatpush1.msra.mxu0 0.0
    %538 = vmatprep.subr.mxu0 0.0
    %539 = vmatpush1.msra.mxu0 0.0
    %540 = vmatprep.subr.mxu0 0.0
    %541 = vmatpush1.msra.mxu0 0.0
    %542 = vmatprep.subr.mxu0 0.0
    %543 = vmatpush1.msra.mxu0 0.0
    %544 = vmatprep.subr.mxu0 0.0
    %545 = vmatpush1.msra.mxu0 0.0
    %546 = vmatprep.subr.mxu0 0.0
    %547 = vmatpush1.msra.mxu0 0.0
    %548 = vmatprep.subr.mxu0 0.0
    %549 = vmatpush1.msra.mxu0 0.0
    %550 = vmatprep.subr.mxu0 0.0
    %551 = vmatpush1.msra.mxu0 0.0
    %552 = vmatprep.subr.mxu0 0.0
    %553 = vmatpush1.msra.mxu0 0.0
    %554 = vmatprep.subr.mxu0 0.0
    %555 = vmatpush1.msra.mxu0 0.0
    %556 = vmatprep.subr.mxu0 0.0
    %557 = vmatpush1.msra.mxu0 0.0
    %558 = vmatprep.mubr.f32.mxu0 0.0
    %559 = vmatmul.mubr.f32.gmra.mrb[0].mxu0 %v492
    %v560 = vpop.f32.mrb[0].mxu0
    %v561 = vadd.f32 0.0, %v560
    %v562 = vpop.f32.mrb[0].mxu0
    %563 = vdwg.mxu0
    %v564 = vadd.f32 %v314, %v561
    %v565 = vtanh.pop %v564
    %566 = vst.msk [vmem:[#allocation2 + $0x18] sm:$0xff] %vm207, %v565
    %v568 = vsel %vm207, %v565, 0
    %570 = vmatprep.subr.mxu0 0.0
    %571 = vmatpush1.msra.mxu0 %v198
    %572 = vmatprep.subr.mxu0 0.0
    %573 = vmatpush1.msra.mxu0 %v199
    %574 = vmatprep.subr.mxu0 0.0
    %575 = vmatpush1.msra.mxu0 %v200
    %576 = vmatprep.subr.mxu0 0.0
    %577 = vmatpush1.msra.mxu0 %v201
    %578 = vmatprep.subr.mxu0 0.0
    %579 = vmatpush1.msra.mxu0 0.0
    %580 = vmatprep.subr.mxu0 0.0
    %581 = vmatpush1.msra.mxu0 0.0
    %582 = vmatprep.subr.mxu0 0.0
    %583 = vmatpush1.msra.mxu0 0.0
    %584 = vmatprep.subr.mxu0 0.0
    %585 = vmatpush1.msra.mxu0 0.0
    %586 = vmatprep.subr.mxu0 0.0
    %587 = vmatpush1.msra.mxu0 0.0
    %588 = vmatprep.subr.mxu0 0.0
    %589 = vmatpush1.msra.mxu0 0.0
    %590 = vmatprep.subr.mxu0 0.0
    %591 = vmatpush1.msra.mxu0 0.0
    %592 = vmatprep.subr.mxu0 0.0
    %593 = vmatpush1.msra.mxu0 0.0
    %594 = vmatprep.subr.mxu0 0.0
    %595 = vmatpush1.msra.mxu0 0.0
    %596 = vmatprep.subr.mxu0 0.0
    %597 = vmatpush1.msra.mxu0 0.0
    %598 = vmatprep.subr.mxu0 0.0
    %599 = vmatpush1.msra.mxu0 0.0
    %600 = vmatprep.subr.mxu0 0.0
    %601 = vmatpush1.msra.mxu0 0.0
    %602 = vmatprep.subr.mxu0 0.0
    %603 = vmatpush1.msra.mxu0 0.0
    %604 = vmatprep.subr.mxu0 0.0
    %605 = vmatpush1.msra.mxu0 0.0
    %606 = vmatprep.subr.mxu0 0.0
    %607 = vmatpush1.msra.mxu0 0.0
    %608 = vmatprep.subr.mxu0 0.0
    %609 = vmatpush1.msra.mxu0 0.0
    %610 = vmatprep.subr.mxu0 0.0
    %611 = vmatpush1.msra.mxu0 0.0
    %612 = vmatprep.subr.mxu0 0.0
    %613 = vmatpush1.msra.mxu0 0.0
    %614 = vmatprep.subr.mxu0 0.0
    %615 = vmatpush1.msra.mxu0 0.0
    %616 = vmatprep.subr.mxu0 0.0
    %617 = vmatpush1.msra.mxu0 0.0
    %618 = vmatprep.subr.mxu0 0.0
    %619 = vmatpush1.msra.mxu0 0.0
    %620 = vmatprep.subr.mxu0 0.0
    %621 = vmatpush1.msra.mxu0 0.0
    %622 = vmatprep.subr.mxu0 0.0
    %623 = vmatpush1.msra.mxu0 0.0
    %624 = vmatprep.subr.mxu0 0.0
    %625 = vmatpush1.msra.mxu0 0.0
    %626 = vmatprep.subr.mxu0 0.0
    %627 = vmatpush1.msra.mxu0 0.0
    %628 = vmatprep.subr.mxu0 0.0
    %629 = vmatpush1.msra.mxu0 0.0
    %630 = vmatprep.subr.mxu0 0.0
    %631 = vmatpush1.msra.mxu0 0.0
    %632 = vmatprep.subr.mxu0 0.0
    %633 = vmatpush1.msra.mxu0 0.0
    %634 = vmatprep.mubr.f32.mxu0 0.0
    %635 = vmatmul.mubr.f32.gmra.mrb[0].mxu0 %v568
    %v636 = vpop.f32.mrb[0].mxu0
    %v637 = vadd.f32 0.0, %v636
    %v638 = vpop.f32.mrb[0].mxu0
    %639 = vdwg.mxu0
    %v640 = vadd.f32 %v319, %v637
    %v641 = vtanh.pop %v640
    %642 = vst.msk [vmem:[#allocation2 + $0x20] sm:$0xff] %vm207, %v641
    %v644 = vsel %vm207, %v641, 0
    %646 = vmatprep.subr.mxu0 0.0
    %647 = vmatpush1.msra.mxu0 %v198
    %648 = vmatprep.subr.mxu0 0.0
    %649 = vmatpush1.msra.mxu0 %v199
    %650 = vmatprep.subr.mxu0 0.0
    %651 = vmatpush1.msra.mxu0 %v200
    %652 = vmatprep.subr.mxu0 0.0
    %653 = vmatpush1.msra.mxu0 %v201
    %654 = vmatprep.subr.mxu0 0.0
    %655 = vmatpush1.msra.mxu0 0.0
    %656 = vmatprep.subr.mxu0 0.0
    %657 = vmatpush1.msra.mxu0 0.0
    %658 = vmatprep.subr.mxu0 0.0
    %659 = vmatpush1.msra.mxu0 0.0
    %660 = vmatprep.subr.mxu0 0.0
    %661 = vmatpush1.msra.mxu0 0.0
    %662 = vmatprep.subr.mxu0 0.0
    %663 = vmatpush1.msra.mxu0 0.0
    %664 = vmatprep.subr.mxu0 0.0
    %665 = vmatpush1.msra.mxu0 0.0
    %666 = vmatprep.subr.mxu0 0.0
    %667 = vmatpush1.msra.mxu0 0.0
    %668 = vmatprep.subr.mxu0 0.0
    %669 = vmatpush1.msra.mxu0 0.0
    %670 = vmatprep.subr.mxu0 0.0
    %671 = vmatpush1.msra.mxu0 0.0
    %672 = vmatprep.subr.mxu0 0.0
    %673 = vmatpush1.msra.mxu0 0.0
    %674 = vmatprep.subr.mxu0 0.0
    %675 = vmatpush1.msra.mxu0 0.0
    %676 = vmatprep.subr.mxu0 0.0
    %677 = vmatpush1.msra.mxu0 0.0
    %678 = vmatprep.subr.mxu0 0.0
    %679 = vmatpush1.msra.mxu0 0.0
    %680 = vmatprep.subr.mxu0 0.0
    %681 = vmatpush1.msra.mxu0 0.0
    %682 = vmatprep.subr.mxu0 0.0
    %683 = vmatpush1.msra.mxu0 0.0
    %684 = vmatprep.subr.mxu0 0.0
    %685 = vmatpush1.msra.mxu0 0.0
    %686 = vmatprep.subr.mxu0 0.0
    %687 = vmatpush1.msra.mxu0 0.0
    %688 = vmatprep.subr.mxu0 0.0
    %689 = vmatpush1.msra.mxu0 0.0
    %690 = vmatprep.subr.mxu0 0.0
    %691 = vmatpush1.msra.mxu0 0.0
    %692 = vmatprep.subr.mxu0 0.0
    %693 = vmatpush1.msra.mxu0 0.0
    %694 = vmatprep.subr.mxu0 0.0
    %695 = vmatpush1.msra.mxu0 0.0
    %696 = vmatprep.subr.mxu0 0.0
    %697 = vmatpush1.msra.mxu0 0.0
    %698 = vmatprep.subr.mxu0 0.0
    %699 = vmatpush1.msra.mxu0 0.0
    %700 = vmatprep.subr.mxu0 0.0
    %701 = vmatpush1.msra.mxu0 0.0
    %702 = vmatprep.subr.mxu0 0.0
    %703 = vmatpush1.msra.mxu0 0.0
    %704 = vmatprep.subr.mxu0 0.0
    %705 = vmatpush1.msra.mxu0 0.0
    %706 = vmatprep.subr.mxu0 0.0
    %707 = vmatpush1.msra.mxu0 0.0
    %708 = vmatprep.subr.mxu0 0.0
    %709 = vmatpush1.msra.mxu0 0.0
    %710 = vmatprep.mubr.f32.mxu0 0.0
    %711 = vmatmul.mubr.f32.gmra.mrb[0].mxu0 %v644
    %v712 = vpop.f32.mrb[0].mxu0
    %v713 = vadd.f32 0.0, %v712
    %v714 = vpop.f32.mrb[0].mxu0
    %715 = vdwg.mxu0
    %v716 = vadd.f32 %v324, %v713
    %v717 = vtanh.pop %v716
    %718 = vst.msk [vmem:[#allocation2 + $0x28] sm:$0xff] %vm207, %v717
    %v720 = vsel %vm207, %v717, 0
    %722 = vmatprep.subr.mxu0 0.0
    %723 = vmatpush1.msra.mxu0 %v198
    %724 = vmatprep.subr.mxu0 0.0
    %725 = vmatpush1.msra.mxu0 %v199
    %726 = vmatprep.subr.mxu0 0.0
    %727 = vmatpush1.msra.mxu0 %v200
    %728 = vmatprep.subr.mxu0 0.0
    %729 = vmatpush1.msra.mxu0 %v201
    %730 = vmatprep.subr.mxu0 0.0
    %731 = vmatpush1.msra.mxu0 0.0
    %732 = vmatprep.subr.mxu0 0.0
    %733 = vmatpush1.msra.mxu0 0.0
    %734 = vmatprep.subr.mxu0 0.0
    %735 = vmatpush1.msra.mxu0 0.0
    %736 = vmatprep.subr.mxu0 0.0
    %737 = vmatpush1.msra.mxu0 0.0
    %738 = vmatprep.subr.mxu0 0.0
    %739 = vmatpush1.msra.mxu0 0.0
    %740 = vmatprep.subr.mxu0 0.0
    %741 = vmatpush1.msra.mxu0 0.0
    %742 = vmatprep.subr.mxu0 0.0
    %743 = vmatpush1.msra.mxu0 0.0
    %744 = vmatprep.subr.mxu0 0.0
    %745 = vmatpush1.msra.mxu0 0.0
    %746 = vmatprep.subr.mxu0 0.0
    %747 = vmatpush1.msra.mxu0 0.0
    %748 = vmatprep.subr.mxu0 0.0
    %749 = vmatpush1.msra.mxu0 0.0
    %750 = vmatprep.subr.mxu0 0.0
    %751 = vmatpush1.msra.mxu0 0.0
    %752 = vmatprep.subr.mxu0 0.0
    %753 = vmatpush1.msra.mxu0 0.0
    %754 = vmatprep.subr.mxu0 0.0
    %755 = vmatpush1.msra.mxu0 0.0
    %756 = vmatprep.subr.mxu0 0.0
    %757 = vmatpush1.msra.mxu0 0.0
    %758 = vmatprep.subr.mxu0 0.0
    %759 = vmatpush1.msra.mxu0 0.0
    %760 = vmatprep.subr.mxu0 0.0
    %761 = vmatpush1.msra.mxu0 0.0
    %762 = vmatprep.subr.mxu0 0.0
    %763 = vmatpush1.msra.mxu0 0.0
    %764 = vmatprep.subr.mxu0 0.0
    %765 = vmatpush1.msra.mxu0 0.0
    %766 = vmatprep.subr.mxu0 0.0
    %767 = vmatpush1.msra.mxu0 0.0
    %768 = vmatprep.subr.mxu0 0.0
    %769 = vmatpush1.msra.mxu0 0.0
    %770 = vmatprep.subr.mxu0 0.0
    %771 = vmatpush1.msra.mxu0 0.0
    %772 = vmatprep.subr.mxu0 0.0
    %773 = vmatpush1.msra.mxu0 0.0
    %774 = vmatprep.subr.mxu0 0.0
    %775 = vmatpush1.msra.mxu0 0.0
    %776 = vmatprep.subr.mxu0 0.0
    %777 = vmatpush1.msra.mxu0 0.0
    %778 = vmatprep.subr.mxu0 0.0
    %779 = vmatpush1.msra.mxu0 0.0
    %780 = vmatprep.subr.mxu0 0.0
    %781 = vmatpush1.msra.mxu0 0.0
    %782 = vmatprep.subr.mxu0 0.0
    %783 = vmatpush1.msra.mxu0 0.0
    %784 = vmatprep.subr.mxu0 0.0
    %785 = vmatpush1.msra.mxu0 0.0
    %786 = vmatprep.mubr.f32.mxu0 0.0
    %787 = vmatmul.mubr.f32.gmra.mrb[0].mxu0 %v720
    %v788 = vpop.f32.mrb[0].mxu0
    %v789 = vadd.f32 0.0, %v788
    %v790 = vpop.f32.mrb[0].mxu0
    %791 = vdwg.mxu0
    %v792 = vadd.f32 %v329, %v789
    %v793 = vtanh.pop %v792
    %794 = vst.msk [vmem:[#allocation2 + $0x30] sm:$0xff] %vm207, %v793
    %v796 = vsel %vm207, %v793, 0
    %798 = vmatprep.subr.mxu0 0.0
    %799 = vmatpush1.msra.mxu0 %v198
    %800 = vmatprep.subr.mxu0 0.0
    %801 = vmatpush1.msra.mxu0 %v199
    %802 = vmatprep.subr.mxu0 0.0
    %803 = vmatpush1.msra.mxu0 %v200
    %804 = vmatprep.subr.mxu0 0.0
    %805 = vmatpush1.msra.mxu0 %v201
    %806 = vmatprep.subr.mxu0 0.0
    %807 = vmatpush1.msra.mxu0 0.0
    %808 = vmatprep.subr.mxu0 0.0
    %809 = vmatpush1.msra.mxu0 0.0
    %810 = vmatprep.subr.mxu0 0.0
    %811 = vmatpush1.msra.mxu0 0.0
    %812 = vmatprep.subr.mxu0 0.0
    %813 = vmatpush1.msra.mxu0 0.0
    %814 = vmatprep.subr.mxu0 0.0
    %815 = vmatpush1.msra.mxu0 0.0
    %816 = vmatprep.subr.mxu0 0.0
    %817 = vmatpush1.msra.mxu0 0.0
    %818 = vmatprep.subr.mxu0 0.0
    %819 = vmatpush1.msra.mxu0 0.0
    %820 = vmatprep.subr.mxu0 0.0
    %821 = vmatpush1.msra.mxu0 0.0
    %822 = vmatprep.subr.mxu0 0.0
    %823 = vmatpush1.msra.mxu0 0.0
    %824 = vmatprep.subr.mxu0 0.0
    %825 = vmatpush1.msra.mxu0 0.0
    %826 = vmatprep.subr.mxu0 0.0
    %827 = vmatpush1.msra.mxu0 0.0
    %828 = vmatprep.subr.mxu0 0.0
    %829 = vmatpush1.msra.mxu0 0.0
    %830 = vmatprep.subr.mxu0 0.0
    %831 = vmatpush1.msra.mxu0 0.0
    %832 = vmatprep.subr.mxu0 0.0
    %833 = vmatpush1.msra.mxu0 0.0
    %834 = vmatprep.subr.mxu0 0.0
    %835 = vmatpush1.msra.mxu0 0.0
    %836 = vmatprep.subr.mxu0 0.0
    %837 = vmatpush1.msra.mxu0 0.0
    %838 = vmatprep.subr.mxu0 0.0
    %839 = vmatpush1.msra.mxu0 0.0
    %840 = vmatprep.subr.mxu0 0.0
    %841 = vmatpush1.msra.mxu0 0.0
    %842 = vmatprep.subr.mxu0 0.0
    %843 = vmatpush1.msra.mxu0 0.0
    %844 = vmatprep.subr.mxu0 0.0
    %845 = vmatpush1.msra.mxu0 0.0
    %846 = vmatprep.subr.mxu0 0.0
    %847 = vmatpush1.msra.mxu0 0.0
    %848 = vmatprep.subr.mxu0 0.0
    %849 = vmatpush1.msra.mxu0 0.0
    %850 = vmatprep.subr.mxu0 0.0
    %851 = vmatpush1.msra.mxu0 0.0
    %852 = vmatprep.subr.mxu0 0.0
    %853 = vmatpush1.msra.mxu0 0.0
    %854 = vmatprep.subr.mxu0 0.0
    %855 = vmatpush1.msra.mxu0 0.0
    %856 = vmatprep.subr.mxu0 0.0
    %857 = vmatpush1.msra.mxu0 0.0
    %858 = vmatprep.subr.mxu0 0.0
    %859 = vmatpush1.msra.mxu0 0.0
    %860 = vmatprep.subr.mxu0 0.0
    %861 = vmatpush1.msra.mxu0 0.0
    %862 = vmatprep.mubr.f32.mxu0 0.0
    %863 = vmatmul.mubr.f32.gmra.mrb[0].mxu0 %v796
    %v864 = vpop.f32.mrb[0].mxu0
    %v865 = vadd.f32 0.0, %v864
    %v866 = vpop.f32.mrb[0].mxu0
    %867 = vdwg.mxu0
    %v868 = vadd.f32 %v334, %v865
    %v869 = vtanh.pop %v868
    %870 = vst.msk [vmem:[#allocation2 + $0x38] sm:$0xff] %vm207, %v869
    %v871 = vld [vmem:[#allocation2] sm:$0xff]
    %v872 = vld [vmem:[#allocation2 + $0x8] sm:$0xff]
    %v873 = vld [vmem:[#allocation2 + $0x10] sm:$0xff]
    %v874 = vld [vmem:[#allocation2 + $0x18] sm:$0xff]
    %v875 = vld [vmem:[#allocation2 + $0x20] sm:$0xff]
    %v876 = vld [vmem:[#allocation2 + $0x28] sm:$0xff]
    %v877 = vld [vmem:[#allocation2 + $0x30] sm:$0xff]
    %v878 = vld [vmem:[#allocation2 + $0x38] sm:$0xff]
    %v879 = vld [vmem:[%s1 + $0xc8] sm:$0xff]
    %v880 = vld [vmem:[%s1 + $0xd0] sm:$0xff]
    %v881 = vld [vmem:[%s1 + $0xd8] sm:$0xff]
    %v882 = vld [vmem:[%s1 + $0xe0] sm:$0xff]
    %v883 = vld [vmem:[%s1 + $0xe8] sm:$0xff]
    %v884 = vld [vmem:[%s1 + $0xf0] sm:$0xff]
    %v885 = vld [vmem:[%s1 + $0xf8] sm:$0xff]
    %v886 = vld [vmem:[%s1 + $0x100] sm:$0xff]
    %v887 = vld [vmem:[%s1 + $0x108] sm:$0x1]
    %v888 = vlaneseq
    %v889 = vshrl.u32 %v888, 7
    %v890 = vsub.s32 0, %v889
    %v891 = vrot.slane %v887, %v890
    %v893 = vsel %vm207, %v871, 0
    %v896 = vsel %vm207, %v872, 0
    %v899 = vsel %vm207, %v873, 0
    %v902 = vsel %vm207, %v874, 0
    %v905 = vsel %vm207, %v875, 0
    %v908 = vsel %vm207, %v876, 0
    %v911 = vsel %vm207, %v877, 0
    %v914 = vsel %vm207, %v878, 0
    %916 = vmatprep.subr.mxu0 0.0
    %917 = vmatpush1.msra.mxu0 %v879
    %918 = vmatprep.subr.mxu0 0.0
    %919 = vmatpush1.msra.mxu0 %v880
    %920 = vmatprep.subr.mxu0 0.0
    %921 = vmatpush1.msra.mxu0 %v881
    %922 = vmatprep.subr.mxu0 0.0
    %923 = vmatpush1.msra.mxu0 %v882
    %924 = vmatprep.subr.mxu0 0.0
    %925 = vmatpush1.msra.mxu0 0.0
    %926 = vmatprep.subr.mxu0 0.0
    %927 = vmatpush1.msra.mxu0 0.0
    %928 = vmatprep.subr.mxu0 0.0
    %929 = vmatpush1.msra.mxu0 0.0
    %930 = vmatprep.subr.mxu0 0.0
    %931 = vmatpush1.msra.mxu0 0.0
    %932 = vmatprep.subr.mxu0 0.0
    %933 = vmatpush1.msra.mxu0 0.0
    %934 = vmatprep.subr.mxu0 0.0
    %935 = vmatpush1.msra.mxu0 0.0
    %936 = vmatprep.subr.mxu0 0.0
    %937 = vmatpush1.msra.mxu0 0.0
    %938 = vmatprep.subr.mxu0 0.0
    %939 = vmatpush1.msra.mxu0 0.0
    %940 = vmatprep.subr.mxu0 0.0
    %941 = vmatpush1.msra.mxu0 0.0
    %942 = vmatprep.subr.mxu0 0.0
    %943 = vmatpush1.msra.mxu0 0.0
    %944 = vmatprep.subr.mxu0 0.0
    %945 = vmatpush1.msra.mxu0 0.0
    %946 = vmatprep.subr.mxu0 0.0
    %947 = vmatpush1.msra.mxu0 0.0
    %948 = vmatprep.subr.mxu0 0.0
    %949 = vmatpush1.msra.mxu0 0.0
    %950 = vmatprep.subr.mxu0 0.0
    %951 = vmatpush1.msra.mxu0 0.0
    %952 = vmatprep.subr.mxu0 0.0
    %953 = vmatpush1.msra.mxu0 0.0
    %954 = vmatprep.subr.mxu0 0.0
    %955 = vmatpush1.msra.mxu0 0.0
    %956 = vmatprep.subr.mxu0 0.0
    %957 = vmatpush1.msra.mxu0 0.0
    %958 = vmatprep.subr.mxu0 0.0
    %959 = vmatpush1.msra.mxu0 0.0
    %960 = vmatprep.subr.mxu0 0.0
    %961 = vmatpush1.msra.mxu0 0.0
    %962 = vmatprep.subr.mxu0 0.0
    %963 = vmatpush1.msra.mxu0 0.0
    %964 = vmatprep.subr.mxu0 0.0
    %965 = vmatpush1.msra.mxu0 0.0
    %966 = vmatprep.subr.mxu0 0.0
    %967 = vmatpush1.msra.mxu0 0.0
    %968 = vmatprep.subr.mxu0 0.0
    %969 = vmatpush1.msra.mxu0 0.0
    %970 = vmatprep.subr.mxu0 0.0
    %971 = vmatpush1.msra.mxu0 0.0
    %972 = vmatprep.subr.mxu0 0.0
    %973 = vmatpush1.msra.mxu0 0.0
    %974 = vmatprep.subr.mxu0 0.0
    %975 = vmatpush1.msra.mxu0 0.0
    %976 = vmatprep.subr.mxu0 0.0
    %977 = vmatpush1.msra.mxu0 0.0
    %978 = vmatprep.subr.mxu0 0.0
    %979 = vmatpush1.msra.mxu0 0.0
    %980 = vmatprep.mubr.f32.mxu0 0.0
    %981 = vmatmul.mubr.f32.gmra.mrb[0].mxu0 %v893
    %v982 = vpop.f32.mrb[0].mxu0
    %v983 = vadd.f32 %v891, %v982
    %v984 = vpop.f32.mrb[0].mxu0
    %985 = vmatprep.mubr.f32.mxu0 0.0
    %986 = vmatmul.mubr.f32.gmra.mrb[0].mxu0 %v896
    %v987 = vpop.f32.mrb[0].mxu0
    %v988 = vadd.f32 %v891, %v987
    %v989 = vpop.f32.mrb[0].mxu0
    %990 = vmatprep.mubr.f32.mxu0 0.0
    %991 = vmatmul.mubr.f32.gmra.mrb[0].mxu0 %v899
    %v992 = vpop.f32.mrb[0].mxu0
    %v993 = vadd.f32 %v891, %v992
    %v994 = vpop.f32.mrb[0].mxu0
    %995 = vmatprep.mubr.f32.mxu0 0.0
    %996 = vmatmul.mubr.f32.gmra.mrb[0].mxu0 %v902
    %v997 = vpop.f32.mrb[0].mxu0
    %v998 = vadd.f32 %v891, %v997
    %v999 = vpop.f32.mrb[0].mxu0
    %1000 = vmatprep.mubr.f32.mxu0 0.0
    %1001 = vmatmul.mubr.f32.gmra.mrb[0].mxu0 %v905
    %v1002 = vpop.f32.mrb[0].mxu0
    %v1003 = vadd.f32 %v891, %v1002
    %v1004 = vpop.f32.mrb[0].mxu0
    %1005 = vmatprep.mubr.f32.mxu0 0.0
    %1006 = vmatmul.mubr.f32.gmra.mrb[0].mxu0 %v908
    %v1007 = vpop.f32.mrb[0].mxu0
    %v1008 = vadd.f32 %v891, %v1007
    %v1009 = vpop.f32.mrb[0].mxu0
    %1010 = vmatprep.mubr.f32.mxu0 0.0
    %1011 = vmatmul.mubr.f32.gmra.mrb[0].mxu0 %v911
    %v1012 = vpop.f32.mrb[0].mxu0
    %v1013 = vadd.f32 %v891, %v1012
    %v1014 = vpop.f32.mrb[0].mxu0
    %1015 = vmatprep.mubr.f32.mxu0 0.0
    %1016 = vmatmul.mubr.f32.gmra.mrb[0].mxu0 %v914
    %v1017 = vpop.f32.mrb[0].mxu0
    %v1018 = vadd.f32 %v891, %v1017
    %v1019 = vpop.f32.mrb[0].mxu0
    %1020 = vdwg.mxu0
    %v1021 = vtanh.pop %v983
    %v1023 = vsel %vm207, %v1021, 0
    %1025 = vmatprep.subr.mxu0 0.0
    %1026 = vmatpush1.msra.mxu0 %v883
    %1027 = vmatprep.subr.mxu0 0.0
    %1028 = vmatpush1.msra.mxu0 %v884
    %1029 = vmatprep.subr.mxu0 0.0
    %1030 = vmatpush1.msra.mxu0 %v885
    %1031 = vmatprep.subr.mxu0 0.0
    %1032 = vmatpush1.msra.mxu0 %v886
    %1033 = vmatprep.subr.mxu0 0.0
    %1034 = vmatpush1.msra.mxu0 0.0
    %1035 = vmatprep.subr.mxu0 0.0
    %1036 = vmatpush1.msra.mxu0 0.0
    %1037 = vmatprep.subr.mxu0 0.0
    %1038 = vmatpush1.msra.mxu0 0.0
    %1039 = vmatprep.subr.mxu0 0.0
    %1040 = vmatpush1.msra.mxu0 0.0
    %1041 = vmatprep.subr.mxu0 0.0
    %1042 = vmatpush1.msra.mxu0 0.0
    %1043 = vmatprep.subr.mxu0 0.0
    %1044 = vmatpush1.msra.mxu0 0.0
    %1045 = vmatprep.subr.mxu0 0.0
    %1046 = vmatpush1.msra.mxu0 0.0
    %1047 = vmatprep.subr.mxu0 0.0
    %1048 = vmatpush1.msra.mxu0 0.0
    %1049 = vmatprep.subr.mxu0 0.0
    %1050 = vmatpush1.msra.mxu0 0.0
    %1051 = vmatprep.subr.mxu0 0.0
    %1052 = vmatpush1.msra.mxu0 0.0
    %1053 = vmatprep.subr.mxu0 0.0
    %1054 = vmatpush1.msra.mxu0 0.0
    %1055 = vmatprep.subr.mxu0 0.0
    %1056 = vmatpush1.msra.mxu0 0.0
    %1057 = vmatprep.subr.mxu0 0.0
    %1058 = vmatpush1.msra.mxu0 0.0
    %1059 = vmatprep.subr.mxu0 0.0
    %1060 = vmatpush1.msra.mxu0 0.0
    %1061 = vmatprep.subr.mxu0 0.0
    %1062 = vmatpush1.msra.mxu0 0.0
    %1063 = vmatprep.subr.mxu0 0.0
    %1064 = vmatpush1.msra.mxu0 0.0
    %1065 = vmatprep.subr.mxu0 0.0
    %1066 = vmatpush1.msra.mxu0 0.0
    %1067 = vmatprep.subr.mxu0 0.0
    %1068 = vmatpush1.msra.mxu0 0.0
    %1069 = vmatprep.subr.mxu0 0.0
    %1070 = vmatpush1.msra.mxu0 0.0
    %1071 = vmatprep.subr.mxu0 0.0
    %1072 = vmatpush1.msra.mxu0 0.0
    %1073 = vmatprep.subr.mxu0 0.0
    %1074 = vmatpush1.msra.mxu0 0.0
    %1075 = vmatprep.subr.mxu0 0.0
    %1076 = vmatpush1.msra.mxu0 0.0
    %1077 = vmatprep.subr.mxu0 0.0
    %1078 = vmatpush1.msra.mxu0 0.0
    %1079 = vmatprep.subr.mxu0 0.0
    %1080 = vmatpush1.msra.mxu0 0.0
    %1081 = vmatprep.subr.mxu0 0.0
    %1082 = vmatpush1.msra.mxu0 0.0
    %1083 = vmatprep.subr.mxu0 0.0
    %1084 = vmatpush1.msra.mxu0 0.0
    %1085 = vmatprep.subr.mxu0 0.0
    %1086 = vmatpush1.msra.mxu0 0.0
    %1087 = vmatprep.subr.mxu0 0.0
    %1088 = vmatpush1.msra.mxu0 0.0
    %1089 = vmatprep.mubr.f32.mxu0 0.0
    %1090 = vmatmul.mubr.f32.gmra.mrb[0].mxu0 %v1023
    %v1091 = vpop.f32.mrb[0].mxu0
    %v1092 = vadd.f32 0.0, %v1091
    %v1093 = vpop.f32.mrb[0].mxu0
    %1094 = vdwg.mxu0
    %v1095 = vadd.f32 %v988, %v1092
    %v1096 = vtanh.pop %v1095
    %v1098 = vsel %vm207, %v1096, 0
    %1100 = vmatprep.subr.mxu0 0.0
    %1101 = vmatpush1.msra.mxu0 %v883
    %1102 = vmatprep.subr.mxu0 0.0
    %1103 = vmatpush1.msra.mxu0 %v884
    %1104 = vmatprep.subr.mxu0 0.0
    %1105 = vmatpush1.msra.mxu0 %v885
    %1106 = vmatprep.subr.mxu0 0.0
    %1107 = vmatpush1.msra.mxu0 %v886
    %1108 = vmatprep.subr.mxu0 0.0
    %1109 = vmatpush1.msra.mxu0 0.0
    %1110 = vmatprep.subr.mxu0 0.0
    %1111 = vmatpush1.msra.mxu0 0.0
    %1112 = vmatprep.subr.mxu0 0.0
    %1113 = vmatpush1.msra.mxu0 0.0
    %1114 = vmatprep.subr.mxu0 0.0
    %1115 = vmatpush1.msra.mxu0 0.0
    %1116 = vmatprep.subr.mxu0 0.0
    %1117 = vmatpush1.msra.mxu0 0.0
    %1118 = vmatprep.subr.mxu0 0.0
    %1119 = vmatpush1.msra.mxu0 0.0
    %1120 = vmatprep.subr.mxu0 0.0
    %1121 = vmatpush1.msra.mxu0 0.0
    %1122 = vmatprep.subr.mxu0 0.0
    %1123 = vmatpush1.msra.mxu0 0.0
    %1124 = vmatprep.subr.mxu0 0.0
    %1125 = vmatpush1.msra.mxu0 0.0
    %1126 = vmatprep.subr.mxu0 0.0
    %1127 = vmatpush1.msra.mxu0 0.0
    %1128 = vmatprep.subr.mxu0 0.0
    %1129 = vmatpush1.msra.mxu0 0.0
    %1130 = vmatprep.subr.mxu0 0.0
    %1131 = vmatpush1.msra.mxu0 0.0
    %1132 = vmatprep.subr.mxu0 0.0
    %1133 = vmatpush1.msra.mxu0 0.0
    %1134 = vmatprep.subr.mxu0 0.0
    %1135 = vmatpush1.msra.mxu0 0.0
    %1136 = vmatprep.subr.mxu0 0.0
    %1137 = vmatpush1.msra.mxu0 0.0
    %1138 = vmatprep.subr.mxu0 0.0
    %1139 = vmatpush1.msra.mxu0 0.0
    %1140 = vmatprep.subr.mxu0 0.0
    %1141 = vmatpush1.msra.mxu0 0.0
    %1142 = vmatprep.subr.mxu0 0.0
    %1143 = vmatpush1.msra.mxu0 0.0
    %1144 = vmatprep.subr.mxu0 0.0
    %1145 = vmatpush1.msra.mxu0 0.0
    %1146 = vmatprep.subr.mxu0 0.0
    %1147 = vmatpush1.msra.mxu0 0.0
    %1148 = vmatprep.subr.mxu0 0.0
    %1149 = vmatpush1.msra.mxu0 0.0
    %1150 = vmatprep.subr.mxu0 0.0
    %1151 = vmatpush1.msra.mxu0 0.0
    %1152 = vmatprep.subr.mxu0 0.0
    %1153 = vmatpush1.msra.mxu0 0.0
    %1154 = vmatprep.subr.mxu0 0.0
    %1155 = vmatpush1.msra.mxu0 0.0
    %1156 = vmatprep.subr.mxu0 0.0
    %1157 = vmatpush1.msra.mxu0 0.0
    %1158 = vmatprep.subr.mxu0 0.0
    %1159 = vmatpush1.msra.mxu0 0.0
    %1160 = vmatprep.subr.mxu0 0.0
    %1161 = vmatpush1.msra.mxu0 0.0
    %1162 = vmatprep.subr.mxu0 0.0
    %1163 = vmatpush1.msra.mxu0 0.0
    %1164 = vmatprep.mubr.f32.mxu0 0.0
    %1165 = vmatmul.mubr.f32.gmra.mrb[0].mxu0 %v1098
    %v1166 = vpop.f32.mrb[0].mxu0
    %v1167 = vadd.f32 0.0, %v1166
    %v1168 = vpop.f32.mrb[0].mxu0
    %1169 = vdwg.mxu0
    %v1170 = vadd.f32 %v993, %v1167
    %v1171 = vtanh.pop %v1170
    %v1173 = vsel %vm207, %v1171, 0
    %1175 = vmatprep.subr.mxu0 0.0
    %1176 = vmatpush1.msra.mxu0 %v883
    %1177 = vmatprep.subr.mxu0 0.0
    %1178 = vmatpush1.msra.mxu0 %v884
    %1179 = vmatprep.subr.mxu0 0.0
    %1180 = vmatpush1.msra.mxu0 %v885
    %1181 = vmatprep.subr.mxu0 0.0
    %1182 = vmatpush1.msra.mxu0 %v886
    %1183 = vmatprep.subr.mxu0 0.0
    %1184 = vmatpush1.msra.mxu0 0.0
    %1185 = vmatprep.subr.mxu0 0.0
    %1186 = vmatpush1.msra.mxu0 0.0
    %1187 = vmatprep.subr.mxu0 0.0
    %1188 = vmatpush1.msra.mxu0 0.0
    %1189 = vmatprep.subr.mxu0 0.0
    %1190 = vmatpush1.msra.mxu0 0.0
    %1191 = vmatprep.subr.mxu0 0.0
    %1192 = vmatpush1.msra.mxu0 0.0
    %1193 = vmatprep.subr.mxu0 0.0
    %1194 = vmatpush1.msra.mxu0 0.0
    %1195 = vmatprep.subr.mxu0 0.0
    %1196 = vmatpush1.msra.mxu0 0.0
    %1197 = vmatprep.subr.mxu0 0.0
    %1198 = vmatpush1.msra.mxu0 0.0
    %1199 = vmatprep.subr.mxu0 0.0
    %1200 = vmatpush1.msra.mxu0 0.0
    %1201 = vmatprep.subr.mxu0 0.0
    %1202 = vmatpush1.msra.mxu0 0.0
    %1203 = vmatprep.subr.mxu0 0.0
    %1204 = vmatpush1.msra.mxu0 0.0
    %1205 = vmatprep.subr.mxu0 0.0
    %1206 = vmatpush1.msra.mxu0 0.0
    %1207 = vmatprep.subr.mxu0 0.0
    %1208 = vmatpush1.msra.mxu0 0.0
    %1209 = vmatprep.subr.mxu0 0.0
    %1210 = vmatpush1.msra.mxu0 0.0
    %1211 = vmatprep.subr.mxu0 0.0
    %1212 = vmatpush1.msra.mxu0 0.0
    %1213 = vmatprep.subr.mxu0 0.0
    %1214 = vmatpush1.msra.mxu0 0.0
    %1215 = vmatprep.subr.mxu0 0.0
    %1216 = vmatpush1.msra.mxu0 0.0
    %1217 = vmatprep.subr.mxu0 0.0
    %1218 = vmatpush1.msra.mxu0 0.0
    %1219 = vmatprep.subr.mxu0 0.0
    %1220 = vmatpush1.msra.mxu0 0.0
    %1221 = vmatprep.subr.mxu0 0.0
    %1222 = vmatpush1.msra.mxu0 0.0
    %1223 = vmatprep.subr.mxu0 0.0
    %1224 = vmatpush1.msra.mxu0 0.0
    %1225 = vmatprep.subr.mxu0 0.0
    %1226 = vmatpush1.msra.mxu0 0.0
    %1227 = vmatprep.subr.mxu0 0.0
    %1228 = vmatpush1.msra.mxu0 0.0
    %1229 = vmatprep.subr.mxu0 0.0
    %1230 = vmatpush1.msra.mxu0 0.0
    %1231 = vmatprep.subr.mxu0 0.0
    %1232 = vmatpush1.msra.mxu0 0.0
    %1233 = vmatprep.subr.mxu0 0.0
    %1234 = vmatpush1.msra.mxu0 0.0
    %1235 = vmatprep.subr.mxu0 0.0
    %1236 = vmatpush1.msra.mxu0 0.0
    %1237 = vmatprep.subr.mxu0 0.0
    %1238 = vmatpush1.msra.mxu0 0.0
    %1239 = vmatprep.mubr.f32.mxu0 0.0
    %1240 = vmatmul.mubr.f32.gmra.mrb[0].mxu0 %v1173
    %v1241 = vpop.f32.mrb[0].mxu0
    %v1242 = vadd.f32 0.0, %v1241
    %v1243 = vpop.f32.mrb[0].mxu0
    %1244 = vdwg.mxu0
    %v1245 = vadd.f32 %v998, %v1242
    %v1246 = vtanh.pop %v1245
    %v1248 = vsel %vm207, %v1246, 0
    %1250 = vmatprep.subr.mxu0 0.0
    %1251 = vmatpush1.msra.mxu0 %v883
    %1252 = vmatprep.subr.mxu0 0.0
    %1253 = vmatpush1.msra.mxu0 %v884
    %1254 = vmatprep.subr.mxu0 0.0
    %1255 = vmatpush1.msra.mxu0 %v885
    %1256 = vmatprep.subr.mxu0 0.0
    %1257 = vmatpush1.msra.mxu0 %v886
    %1258 = vmatprep.subr.mxu0 0.0
    %1259 = vmatpush1.msra.mxu0 0.0
    %1260 = vmatprep.subr.mxu0 0.0
    %1261 = vmatpush1.msra.mxu0 0.0
    %1262 = vmatprep.subr.mxu0 0.0
    %1263 = vmatpush1.msra.mxu0 0.0
    %1264 = vmatprep.subr.mxu0 0.0
    %1265 = vmatpush1.msra.mxu0 0.0
    %1266 = vmatprep.subr.mxu0 0.0
    %1267 = vmatpush1.msra.mxu0 0.0
    %1268 = vmatprep.subr.mxu0 0.0
    %1269 = vmatpush1.msra.mxu0 0.0
    %1270 = vmatprep.subr.mxu0 0.0
    %1271 = vmatpush1.msra.mxu0 0.0
    %1272 = vmatprep.subr.mxu0 0.0
    %1273 = vmatpush1.msra.mxu0 0.0
    %1274 = vmatprep.subr.mxu0 0.0
    %1275 = vmatpush1.msra.mxu0 0.0
    %1276 = vmatprep.subr.mxu0 0.0
    %1277 = vmatpush1.msra.mxu0 0.0
    %1278 = vmatprep.subr.mxu0 0.0
    %1279 = vmatpush1.msra.mxu0 0.0
    %1280 = vmatprep.subr.mxu0 0.0
    %1281 = vmatpush1.msra.mxu0 0.0
    %1282 = vmatprep.subr.mxu0 0.0
    %1283 = vmatpush1.msra.mxu0 0.0
    %1284 = vmatprep.subr.mxu0 0.0
    %1285 = vmatpush1.msra.mxu0 0.0
    %1286 = vmatprep.subr.mxu0 0.0
    %1287 = vmatpush1.msra.mxu0 0.0
    %1288 = vmatprep.subr.mxu0 0.0
    %1289 = vmatpush1.msra.mxu0 0.0
    %1290 = vmatprep.subr.mxu0 0.0
    %1291 = vmatpush1.msra.mxu0 0.0
    %1292 = vmatprep.subr.mxu0 0.0
    %1293 = vmatpush1.msra.mxu0 0.0
    %1294 = vmatprep.subr.mxu0 0.0
    %1295 = vmatpush1.msra.mxu0 0.0
    %1296 = vmatprep.subr.mxu0 0.0
    %1297 = vmatpush1.msra.mxu0 0.0
    %1298 = vmatprep.subr.mxu0 0.0
    %1299 = vmatpush1.msra.mxu0 0.0
    %1300 = vmatprep.subr.mxu0 0.0
    %1301 = vmatpush1.msra.mxu0 0.0
    %1302 = vmatprep.subr.mxu0 0.0
    %1303 = vmatpush1.msra.mxu0 0.0
    %1304 = vmatprep.subr.mxu0 0.0
    %1305 = vmatpush1.msra.mxu0 0.0
    %1306 = vmatprep.subr.mxu0 0.0
    %1307 = vmatpush1.msra.mxu0 0.0
    %1308 = vmatprep.subr.mxu0 0.0
    %1309 = vmatpush1.msra.mxu0 0.0
    %1310 = vmatprep.subr.mxu0 0.0
    %1311 = vmatpush1.msra.mxu0 0.0
    %1312 = vmatprep.subr.mxu0 0.0
    %1313 = vmatpush1.msra.mxu0 0.0
    %1314 = vmatprep.mubr.f32.mxu0 0.0
    %1315 = vmatmul.mubr.f32.gmra.mrb[0].mxu0 %v1248
    %v1316 = vpop.f32.mrb[0].mxu0
    %v1317 = vadd.f32 0.0, %v1316
    %v1318 = vpop.f32.mrb[0].mxu0
    %1319 = vdwg.mxu0
    %v1320 = vadd.f32 %v1003, %v1317
    %v1321 = vtanh.pop %v1320
    %v1323 = vsel %vm207, %v1321, 0
    %1325 = vmatprep.subr.mxu0 0.0
    %1326 = vmatpush1.msra.mxu0 %v883
    %1327 = vmatprep.subr.mxu0 0.0
    %1328 = vmatpush1.msra.mxu0 %v884
    %1329 = vmatprep.subr.mxu0 0.0
    %1330 = vmatpush1.msra.mxu0 %v885
    %1331 = vmatprep.subr.mxu0 0.0
    %1332 = vmatpush1.msra.mxu0 %v886
    %1333 = vmatprep.subr.mxu0 0.0
    %1334 = vmatpush1.msra.mxu0 0.0
    %1335 = vmatprep.subr.mxu0 0.0
    %1336 = vmatpush1.msra.mxu0 0.0
    %1337 = vmatprep.subr.mxu0 0.0
    %1338 = vmatpush1.msra.mxu0 0.0
    %1339 = vmatprep.subr.mxu0 0.0
    %1340 = vmatpush1.msra.mxu0 0.0
    %1341 = vmatprep.subr.mxu0 0.0
    %1342 = vmatpush1.msra.mxu0 0.0
    %1343 = vmatprep.subr.mxu0 0.0
    %1344 = vmatpush1.msra.mxu0 0.0
    %1345 = vmatprep.subr.mxu0 0.0
    %1346 = vmatpush1.msra.mxu0 0.0
    %1347 = vmatprep.subr.mxu0 0.0
    %1348 = vmatpush1.msra.mxu0 0.0
    %1349 = vmatprep.subr.mxu0 0.0
    %1350 = vmatpush1.msra.mxu0 0.0
    %1351 = vmatprep.subr.mxu0 0.0
    %1352 = vmatpush1.msra.mxu0 0.0
    %1353 = vmatprep.subr.mxu0 0.0
    %1354 = vmatpush1.msra.mxu0 0.0
    %1355 = vmatprep.subr.mxu0 0.0
    %1356 = vmatpush1.msra.mxu0 0.0
    %1357 = vmatprep.subr.mxu0 0.0
    %1358 = vmatpush1.msra.mxu0 0.0
    %1359 = vmatprep.subr.mxu0 0.0
    %1360 = vmatpush1.msra.mxu0 0.0
    %1361 = vmatprep.subr.mxu0 0.0
    %1362 = vmatpush1.msra.mxu0 0.0
    %1363 = vmatprep.subr.mxu0 0.0
    %1364 = vmatpush1.msra.mxu0 0.0
    %1365 = vmatprep.subr.mxu0 0.0
    %1366 = vmatpush1.msra.mxu0 0.0
    %1367 = vmatprep.subr.mxu0 0.0
    %1368 = vmatpush1.msra.mxu0 0.0
    %1369 = vmatprep.subr.mxu0 0.0
    %1370 = vmatpush1.msra.mxu0 0.0
    %1371 = vmatprep.subr.mxu0 0.0
    %1372 = vmatpush1.msra.mxu0 0.0
    %1373 = vmatprep.subr.mxu0 0.0
    %1374 = vmatpush1.msra.mxu0 0.0
    %1375 = vmatprep.subr.mxu0 0.0
    %1376 = vmatpush1.msra.mxu0 0.0
    %1377 = vmatprep.subr.mxu0 0.0
    %1378 = vmatpush1.msra.mxu0 0.0
    %1379 = vmatprep.subr.mxu0 0.0
    %1380 = vmatpush1.msra.mxu0 0.0
    %1381 = vmatprep.subr.mxu0 0.0
    %1382 = vmatpush1.msra.mxu0 0.0
    %1383 = vmatprep.subr.mxu0 0.0
    %1384 = vmatpush1.msra.mxu0 0.0
    %1385 = vmatprep.subr.mxu0 0.0
    %1386 = vmatpush1.msra.mxu0 0.0
    %1387 = vmatprep.subr.mxu0 0.0
    %1388 = vmatpush1.msra.mxu0 0.0
    %1389 = vmatprep.mubr.f32.mxu0 0.0
    %1390 = vmatmul.mubr.f32.gmra.mrb[0].mxu0 %v1323
    %v1391 = vpop.f32.mrb[0].mxu0
    %v1392 = vadd.f32 0.0, %v1391
    %v1393 = vpop.f32.mrb[0].mxu0
    %1394 = vdwg.mxu0
    %v1395 = vadd.f32 %v1008, %v1392
    %v1396 = vtanh.pop %v1395
    %v1398 = vsel %vm207, %v1396, 0
    %1400 = vmatprep.subr.mxu0 0.0
    %1401 = vmatpush1.msra.mxu0 %v883
    %1402 = vmatprep.subr.mxu0 0.0
    %1403 = vmatpush1.msra.mxu0 %v884
    %1404 = vmatprep.subr.mxu0 0.0
    %1405 = vmatpush1.msra.mxu0 %v885
    %1406 = vmatprep.subr.mxu0 0.0
    %1407 = vmatpush1.msra.mxu0 %v886
    %1408 = vmatprep.subr.mxu0 0.0
    %1409 = vmatpush1.msra.mxu0 0.0
    %1410 = vmatprep.subr.mxu0 0.0
    %1411 = vmatpush1.msra.mxu0 0.0
    %1412 = vmatprep.subr.mxu0 0.0
    %1413 = vmatpush1.msra.mxu0 0.0
    %1414 = vmatprep.subr.mxu0 0.0
    %1415 = vmatpush1.msra.mxu0 0.0
    %1416 = vmatprep.subr.mxu0 0.0
    %1417 = vmatpush1.msra.mxu0 0.0
    %1418 = vmatprep.subr.mxu0 0.0
    %1419 = vmatpush1.msra.mxu0 0.0
    %1420 = vmatprep.subr.mxu0 0.0
    %1421 = vmatpush1.msra.mxu0 0.0
    %1422 = vmatprep.subr.mxu0 0.0
    %1423 = vmatpush1.msra.mxu0 0.0
    %1424 = vmatprep.subr.mxu0 0.0
    %1425 = vmatpush1.msra.mxu0 0.0
    %1426 = vmatprep.subr.mxu0 0.0
    %1427 = vmatpush1.msra.mxu0 0.0
    %1428 = vmatprep.subr.mxu0 0.0
    %1429 = vmatpush1.msra.mxu0 0.0
    %1430 = vmatprep.subr.mxu0 0.0
    %1431 = vmatpush1.msra.mxu0 0.0
    %1432 = vmatprep.subr.mxu0 0.0
    %1433 = vmatpush1.msra.mxu0 0.0
    %1434 = vmatprep.subr.mxu0 0.0
    %1435 = vmatpush1.msra.mxu0 0.0
    %1436 = vmatprep.subr.mxu0 0.0
    %1437 = vmatpush1.msra.mxu0 0.0
    %1438 = vmatprep.subr.mxu0 0.0
    %1439 = vmatpush1.msra.mxu0 0.0
    %1440 = vmatprep.subr.mxu0 0.0
    %1441 = vmatpush1.msra.mxu0 0.0
    %1442 = vmatprep.subr.mxu0 0.0
    %1443 = vmatpush1.msra.mxu0 0.0
    %1444 = vmatprep.subr.mxu0 0.0
    %1445 = vmatpush1.msra.mxu0 0.0
    %1446 = vmatprep.subr.mxu0 0.0
    %1447 = vmatpush1.msra.mxu0 0.0
    %1448 = vmatprep.subr.mxu0 0.0
    %1449 = vmatpush1.msra.mxu0 0.0
    %1450 = vmatprep.subr.mxu0 0.0
    %1451 = vmatpush1.msra.mxu0 0.0
    %1452 = vmatprep.subr.mxu0 0.0
    %1453 = vmatpush1.msra.mxu0 0.0
    %1454 = vmatprep.subr.mxu0 0.0
    %1455 = vmatpush1.msra.mxu0 0.0
    %1456 = vmatprep.subr.mxu0 0.0
    %1457 = vmatpush1.msra.mxu0 0.0
    %1458 = vmatprep.subr.mxu0 0.0
    %1459 = vmatpush1.msra.mxu0 0.0
    %1460 = vmatprep.subr.mxu0 0.0
    %1461 = vmatpush1.msra.mxu0 0.0
    %1462 = vmatprep.subr.mxu0 0.0
    %1463 = vmatpush1.msra.mxu0 0.0
    %1464 = vmatprep.mubr.f32.mxu0 0.0
    %1465 = vmatmul.mubr.f32.gmra.mrb[0].mxu0 %v1398
    %v1466 = vpop.f32.mrb[0].mxu0
    %v1467 = vadd.f32 0.0, %v1466
    %v1468 = vpop.f32.mrb[0].mxu0
    %1469 = vdwg.mxu0
    %v1470 = vadd.f32 %v1013, %v1467
    %v1471 = vtanh.pop %v1470
    %v1473 = vsel %vm207, %v1471, 0
    %1475 = vmatprep.subr.mxu0 0.0
    %1476 = vmatpush1.msra.mxu0 %v883
    %1477 = vmatprep.subr.mxu0 0.0
    %1478 = vmatpush1.msra.mxu0 %v884
    %1479 = vmatprep.subr.mxu0 0.0
    %1480 = vmatpush1.msra.mxu0 %v885
    %1481 = vmatprep.subr.mxu0 0.0
    %1482 = vmatpush1.msra.mxu0 %v886
    %1483 = vmatprep.subr.mxu0 0.0
    %1484 = vmatpush1.msra.mxu0 0.0
    %1485 = vmatprep.subr.mxu0 0.0
    %1486 = vmatpush1.msra.mxu0 0.0
    %1487 = vmatprep.subr.mxu0 0.0
    %1488 = vmatpush1.msra.mxu0 0.0
    %1489 = vmatprep.subr.mxu0 0.0
    %1490 = vmatpush1.msra.mxu0 0.0
    %1491 = vmatprep.subr.mxu0 0.0
    %1492 = vmatpush1.msra.mxu0 0.0
    %1493 = vmatprep.subr.mxu0 0.0
    %1494 = vmatpush1.msra.mxu0 0.0
    %1495 = vmatprep.subr.mxu0 0.0
    %1496 = vmatpush1.msra.mxu0 0.0
    %1497 = vmatprep.subr.mxu0 0.0
    %1498 = vmatpush1.msra.mxu0 0.0
    %1499 = vmatprep.subr.mxu0 0.0
    %1500 = vmatpush1.msra.mxu0 0.0
    %1501 = vmatprep.subr.mxu0 0.0
    %1502 = vmatpush1.msra.mxu0 0.0
    %1503 = vmatprep.subr.mxu0 0.0
    %1504 = vmatpush1.msra.mxu0 0.0
    %1505 = vmatprep.subr.mxu0 0.0
    %1506 = vmatpush1.msra.mxu0 0.0
    %1507 = vmatprep.subr.mxu0 0.0
    %1508 = vmatpush1.msra.mxu0 0.0
    %1509 = vmatprep.subr.mxu0 0.0
    %1510 = vmatpush1.msra.mxu0 0.0
    %1511 = vmatprep.subr.mxu0 0.0
    %1512 = vmatpush1.msra.mxu0 0.0
    %1513 = vmatprep.subr.mxu0 0.0
    %1514 = vmatpush1.msra.mxu0 0.0
    %1515 = vmatprep.subr.mxu0 0.0
    %1516 = vmatpush1.msra.mxu0 0.0
    %1517 = vmatprep.subr.mxu0 0.0
    %1518 = vmatpush1.msra.mxu0 0.0
    %1519 = vmatprep.subr.mxu0 0.0
    %1520 = vmatpush1.msra.mxu0 0.0
    %1521 = vmatprep.subr.mxu0 0.0
    %1522 = vmatpush1.msra.mxu0 0.0
    %1523 = vmatprep.subr.mxu0 0.0
    %1524 = vmatpush1.msra.mxu0 0.0
    %1525 = vmatprep.subr.mxu0 0.0
    %1526 = vmatpush1.msra.mxu0 0.0
    %1527 = vmatprep.subr.mxu0 0.0
    %1528 = vmatpush1.msra.mxu0 0.0
    %1529 = vmatprep.subr.mxu0 0.0
    %1530 = vmatpush1.msra.mxu0 0.0
    %1531 = vmatprep.subr.mxu0 0.0
    %1532 = vmatpush1.msra.mxu0 0.0
    %1533 = vmatprep.subr.mxu0 0.0
    %1534 = vmatpush1.msra.mxu0 0.0
    %1535 = vmatprep.subr.mxu0 0.0
    %1536 = vmatpush1.msra.mxu0 0.0
    %1537 = vmatprep.subr.mxu0 0.0
    %1538 = vmatpush1.msra.mxu0 0.0
    %1539 = vmatprep.mubr.f32.mxu0 0.0
    %1540 = vmatmul.mubr.f32.gmra.mrb[0].mxu0 %v1473
    %v1541 = vpop.f32.mrb[0].mxu0
    %v1542 = vadd.f32 0.0, %v1541
    %v1543 = vpop.f32.mrb[0].mxu0
    %1544 = vdwg.mxu0
    %v1545 = vadd.f32 %v1018, %v1542
    %v1546 = vtanh.pop %v1545
    %v1547 = vsel %vm207, %v1546, 0.0
    %1548 = vadd.xlane.f32.xlu0 %v1547
    %v1549 = vpop.xlane.xlu0 %1548
    %v1550 = vrcp.pop 32.0
    %v1551 = vmul.f32 %v1549, %v1550
    %v1552 = vsub.f32 %v1546, %v1551
    %v1553 = vmul.f32 %v1552, %v1552
    %v1554 = vsel %vm207, %v1553, 0.0
    %1555 = vadd.xlane.f32.xlu0 %v1554
    %v1556 = vpop.xlane.xlu0 %1555
    %v1557 = vmul.f32 %v1556, %v1550
    %v1558 = vld [vmem:[%s1 + $0x110] sm:$0x1]
    %v1559 = vld [vmem:[%s1 + $0x118] sm:$0x1]
    %v1560 = vadd.f32 %v1557, 1e-05
    %v1561 = vrsqrt.pop %v1560
    %v1562 = vmul.f32 %v1552, %v1561
    %v1563 = vlaneseq
    %v1564 = vshrl.u32 %v1563, 7
    %v1565 = vsub.s32 0, %v1564
    %v1566 = vrot.slane %v1558, %v1565
    %v1567 = vmul.f32 %v1562, %v1566
    %v1568 = vlaneseq
    %v1569 = vshrl.u32 %v1568, 7
    %v1570 = vsub.s32 0, %v1569
    %v1571 = vrot.slane %v1559, %v1570
    %v1572 = vadd.f32 %v1567, %v1571
    %v1573 = vld [vmem:[%s1 + $0x120] sm:$0xff]
    %v1574 = vld [vmem:[%s1 + $0x128] sm:$0xff]
    %v1575 = vld [vmem:[%s1 + $0x130] sm:$0xff]
    %v1576 = vld [vmem:[%s1 + $0x138] sm:$0xff]
    %v1577 = vld [vmem:[%s1 + $0x140] sm:$0x1]
    %v1578 = vlaneseq
    %v1579 = vshrl.u32 %v1578, 7
    %v1580 = vsub.s32 0, %v1579
    %v1581 = vrot.slane %v1577, %v1580
    %v1583 = vsel %vm207, %v1572, 0
    %1585 = vmatprep.subr.mxu0 0.0
    %1586 = vmatpush1.msra.mxu0 %v1573
    %1587 = vmatprep.subr.mxu0 0.0
    %1588 = vmatpush1.msra.mxu0 %v1574
    %1589 = vmatprep.subr.mxu0 0.0
    %1590 = vmatpush1.msra.mxu0 %v1575
    %1591 = vmatprep.subr.mxu0 0.0
    %1592 = vmatpush1.msra.mxu0 %v1576
    %1593 = vmatprep.subr.mxu0 0.0
    %1594 = vmatpush1.msra.mxu0 0.0
    %1595 = vmatprep.subr.mxu0 0.0
    %1596 = vmatpush1.msra.mxu0 0.0
    %1597 = vmatprep.subr.mxu0 0.0
    %1598 = vmatpush1.msra.mxu0 0.0
    %1599 = vmatprep.subr.mxu0 0.0
    %1600 = vmatpush1.msra.mxu0 0.0
    %1601 = vmatprep.subr.mxu0 0.0
    %1602 = vmatpush1.msra.mxu0 0.0
    %1603 = vmatprep.subr.mxu0 0.0
    %1604 = vmatpush1.msra.mxu0 0.0
    %1605 = vmatprep.subr.mxu0 0.0
    %1606 = vmatpush1.msra.mxu0 0.0
    %1607 = vmatprep.subr.mxu0 0.0
    %1608 = vmatpush1.msra.mxu0 0.0
    %1609 = vmatprep.subr.mxu0 0.0
    %1610 = vmatpush1.msra.mxu0 0.0
    %1611 = vmatprep.subr.mxu0 0.0
    %1612 = vmatpush1.msra.mxu0 0.0
    %1613 = vmatprep.subr.mxu0 0.0
    %1614 = vmatpush1.msra.mxu0 0.0
    %1615 = vmatprep.subr.mxu0 0.0
    %1616 = vmatpush1.msra.mxu0 0.0
    %1617 = vmatprep.subr.mxu0 0.0
    %1618 = vmatpush1.msra.mxu0 0.0
    %1619 = vmatprep.subr.mxu0 0.0
    %1620 = vmatpush1.msra.mxu0 0.0
    %1621 = vmatprep.subr.mxu0 0.0
    %1622 = vmatpush1.msra.mxu0 0.0
    %1623 = vmatprep.subr.mxu0 0.0
    %1624 = vmatpush1.msra.mxu0 0.0
    %1625 = vmatprep.subr.mxu0 0.0
    %1626 = vmatpush1.msra.mxu0 0.0
    %1627 = vmatprep.subr.mxu0 0.0
    %1628 = vmatpush1.msra.mxu0 0.0
    %1629 = vmatprep.subr.mxu0 0.0
    %1630 = vmatpush1.msra.mxu0 0.0
    %1631 = vmatprep.subr.mxu0 0.0
    %1632 = vmatpush1.msra.mxu0 0.0
    %1633 = vmatprep.subr.mxu0 0.0
    %1634 = vmatpush1.msra.mxu0 0.0
    %1635 = vmatprep.subr.mxu0 0.0
    %1636 = vmatpush1.msra.mxu0 0.0
    %1637 = vmatprep.subr.mxu0 0.0
    %1638 = vmatpush1.msra.mxu0 0.0
    %1639 = vmatprep.subr.mxu0 0.0
    %1640 = vmatpush1.msra.mxu0 0.0
    %1641 = vmatprep.subr.mxu0 0.0
    %1642 = vmatpush1.msra.mxu0 0.0
    %1643 = vmatprep.subr.mxu0 0.0
    %1644 = vmatpush1.msra.mxu0 0.0
    %1645 = vmatprep.subr.mxu0 0.0
    %1646 = vmatpush1.msra.mxu0 0.0
    %1647 = vmatprep.subr.mxu0 0.0
    %1648 = vmatpush1.msra.mxu0 0.0
    %1649 = vmatprep.mubr.f32.mxu0 0.0
    %1650 = vmatmul.mubr.f32.gmra.mrb[0].mxu0 %v1583
    %v1651 = vpop.f32.mrb[0].mxu0
    %v1652 = vadd.f32 %v1581, %v1651
    %v1653 = vpop.f32.mrb[0].mxu0
    %1654 = vdwg.mxu0
    %v1655 = vmax.f32 %v1652, 0.0
    %v1656 = vld [vmem:[%s2] sm:$0xff]
    %v1657 = vld [vmem:[%s2 + $0x8] sm:$0xff]
    %v1658 = vld [vmem:[%s2 + $0x10] sm:$0xff]
    %v1659 = vld [vmem:[%s2 + $0x18] sm:$0xff]
    %v1660 = vld [vmem:[%s2 + $0x20] sm:$0x1]
    %v1661 = vlaneseq
    %v1662 = vshrl.u32 %v1661, 7
    %v1663 = vsub.s32 0, %v1662
    %v1664 = vrot.slane %v1660, %v1663
    %v1666 = vsel %vm207, %v1655, 0
    %1668 = vmatprep.subr.mxu0 0.0
    %1669 = vmatpush1.msra.mxu0 %v1656
    %1670 = vmatprep.subr.mxu0 0.0
    %1671 = vmatpush1.msra.mxu0 %v1657
    %1672 = vmatprep.subr.mxu0 0.0
    %1673 = vmatpush1.msra.mxu0 %v1658
    %1674 = vmatprep.subr.mxu0 0.0
    %1675 = vmatpush1.msra.mxu0 %v1659
    %1676 = vmatprep.subr.mxu0 0.0
    %1677 = vmatpush1.msra.mxu0 0.0
    %1678 = vmatprep.subr.mxu0 0.0
    %1679 = vmatpush1.msra.mxu0 0.0
    %1680 = vmatprep.subr.mxu0 0.0
    %1681 = vmatpush1.msra.mxu0 0.0
    %1682 = vmatprep.subr.mxu0 0.0
    %1683 = vmatpush1.msra.mxu0 0.0
    %1684 = vmatprep.subr.mxu0 0.0
    %1685 = vmatpush1.msra.mxu0 0.0
    %1686 = vmatprep.subr.mxu0 0.0
    %1687 = vmatpush1.msra.mxu0 0.0
    %1688 = vmatprep.subr.mxu0 0.0
    %1689 = vmatpush1.msra.mxu0 0.0
    %1690 = vmatprep.subr.mxu0 0.0
    %1691 = vmatpush1.msra.mxu0 0.0
    %1692 = vmatprep.subr.mxu0 0.0
    %1693 = vmatpush1.msra.mxu0 0.0
    %1694 = vmatprep.subr.mxu0 0.0
    %1695 = vmatpush1.msra.mxu0 0.0
    %1696 = vmatprep.subr.mxu0 0.0
    %1697 = vmatpush1.msra.mxu0 0.0
    %1698 = vmatprep.subr.mxu0 0.0
    %1699 = vmatpush1.msra.mxu0 0.0
    %1700 = vmatprep.subr.mxu0 0.0
    %1701 = vmatpush1.msra.mxu0 0.0
    %1702 = vmatprep.subr.mxu0 0.0
    %1703 = vmatpush1.msra.mxu0 0.0
    %1704 = vmatprep.subr.mxu0 0.0
    %1705 = vmatpush1.msra.mxu0 0.0
    %1706 = vmatprep.subr.mxu0 0.0
    %1707 = vmatpush1.msra.mxu0 0.0
    %1708 = vmatprep.subr.mxu0 0.0
    %1709 = vmatpush1.msra.mxu0 0.0
    %1710 = vmatprep.subr.mxu0 0.0
    %1711 = vmatpush1.msra.mxu0 0.0
    %1712 = vmatprep.subr.mxu0 0.0
    %1713 = vmatpush1.msra.mxu0 0.0
    %1714 = vmatprep.subr.mxu0 0.0
    %1715 = vmatpush1.msra.mxu0 0.0
    %1716 = vmatprep.subr.mxu0 0.0
    %1717 = vmatpush1.msra.mxu0 0.0
    %1718 = vmatprep.subr.mxu0 0.0
    %1719 = vmatpush1.msra.mxu0 0.0
    %1720 = vmatprep.subr.mxu0 0.0
    %1721 = vmatpush1.msra.mxu0 0.0
    %1722 = vmatprep.subr.mxu0 0.0
    %1723 = vmatpush1.msra.mxu0 0.0
    %1724 = vmatprep.subr.mxu0 0.0
    %1725 = vmatpush1.msra.mxu0 0.0
    %1726 = vmatprep.subr.mxu0 0.0
    %1727 = vmatpush1.msra.mxu0 0.0
    %1728 = vmatprep.subr.mxu0 0.0
    %1729 = vmatpush1.msra.mxu0 0.0
    %1730 = vmatprep.subr.mxu0 0.0
    %1731 = vmatpush1.msra.mxu0 0.0
    %1732 = vmatprep.mubr.f32.mxu0 0.0
    %1733 = vmatmul.mubr.f32.gmra.mrb[0].mxu0 %v1666
    %v1734 = vpop.f32.mrb[0].mxu0
    %v1735 = vadd.f32 %v1664, %v1734
    %v1736 = vpop.f32.mrb[0].mxu0
    %1737 = vdwg.mxu0
    %1738 = vst [vmem:[#allocation3] sm:$0xff] %v1735
    // Predicated region
    $region14: #{tpu_custom_call.1} parent=1 // pred_check
      _
    $region15: #{tpu_custom_call.1} parent=1 // pred_check_branch
      %1740 = sbr.rel (0) target = $region17
    $region16: #{tpu_custom_call.1} parent=1 // pred_region
      %s1742 = ssub.s32 128, 128
      %1743 = vsyncadd [#allocation4], %s1742
      %s1745 = sshll.u32 [#allocation3], 4
      %s1746 = int_to_ptr.vmem [resolvable:$true] %s1745
      %1748 = dma.vmem_to_hbm [thread:$0]  %s1746, 128, %s3, [#allocation4]
    $region17: #{tpu_custom_call.1} parent=1 // pred_fallthru
      _
    // Predicated region
    $region18: #{tpu_custom_call.1} parent=1 // pred_check
      _
    $region19: #{tpu_custom_call.1} parent=1 // pred_check_branch
      %1750 = sbr.rel (0) target = $region21
    $region20: #{tpu_custom_call.1} parent=1 // pred_region
      %1751 = dma.done [#allocation4], 128
    $region21: #{tpu_custom_call.1} parent=1 // pred_fallthru
      _
    %1752 = vsyncpa [#allocation4], 1

</llo_original>
